<compile_context>
chip_gen: v6e
topology: v6e:2x2x1
jax: 0.10.0
libtpu: 0.0.40
codegen_flags: <defaults>
</compile_context>

<pallas_src>
import functools

import jax
import jax.numpy as jnp
from jax.experimental import pallas as pl
from jax.experimental.pallas import tpu as pltpu

# MXU operand dtype (accumulation is always f32).  bf16 hits the native MXU
# path on v5e/v6e/v7x and halves patch/weight footprint.
MXU_DTYPE = jnp.bfloat16


# ---------------------------------------------------------------------------
# In-kernel helpers (traced inline).  Activations are (C, Hc*Wc) register
# values with the spatial axis in lanes, so everything below is lane-dense.
# ---------------------------------------------------------------------------
def _conv3x3_flat(a, w, b, Hc, Wc):
    """Same-padding 3x3 conv.

    a: (cin, Hc*Wc) f32 activation, w: (cout, 9*cin) MXU_DTYPE weight matrix
    (columns ordered (ky, kx, cin)), b: (cout, 1) f32 bias.
    Returns (cout, Hc*Wc) f32.
    """
    del Hc  # only Wc is needed for the flat-index shifts
    cin, P = a.shape
    # x coordinate of every lane (for the left/right border masks).
    xi = jax.lax.broadcasted_iota(jnp.int32, (1, P), 1) % Wc
    ok_xm1 = xi > 0            # source (x-1) in bounds
    ok_xp1 = xi < (Wc - 1)     # source (x+1) in bounds
    z1 = jnp.zeros((cin, 1), a.dtype)
    zw = jnp.zeros((cin, Wc), a.dtype)

    # Horizontal taps kx = 0,1,2: single-lane shifts + border masks.
    sx = [
        jnp.where(ok_xm1, jnp.concatenate([z1, a[:, :P - 1]], axis=1), 0.0),
        a,
        jnp.where(ok_xp1, jnp.concatenate([a[:, 1:], z1], axis=1), 0.0),
    ]
    # Vertical taps ky = 0,1,2: whole-row lane shifts with zero fill (no mask
    # needed -- the inserted zero rows ARE the top/bottom zero padding).
    taps = []
    for ddy in (-1, 0, 1):
        for s in sx:
            if ddy == -1:
                s = jnp.concatenate([zw, s[:, :P - Wc]], axis=1)
            elif ddy == 1:
                s = jnp.concatenate([s[:, Wc:], zw], axis=1)
            taps.append(s)
    # One im2col slab in registers, one MXU matmul (K = 9*cin), f32 accumulate.
    patches = jnp.concatenate(taps, axis=0).astype(w.dtype)       # (9*cin, P)
    return jnp.dot(w, patches, preferred_element_type=jnp.float32) + b


def _maxpool2_relu_flat(a, sel, Wc):
    """2x2 stride-2 max pool + ReLU in the flat layout.

    a: (C, Hc*Wc) f32; sel: (Hc*Wc, Hc*Wc//4) 0/1 f32 matrix that keeps only
    the even-(y, x) window anchors (one tiny MXU matmul, no reshapes).
    """
    C, P = a.shape
    z1 = jnp.zeros((C, 1), a.dtype)
    zw = jnp.zeros((C, Wc), a.dtype)
    h = jnp.maximum(a, jnp.concatenate([a[:, 1:], z1], axis=1))   # max(a[p], a[p+1])
    v = jnp.maximum(h, jnp.concatenate([h[:, Wc:], zw], axis=1))  # + next row
    # Invalid anchors (odd x / odd y / wrapped) are dropped by `sel`, so the
    # zero fill above never contaminates the result.
    return jnp.maximum(jnp.dot(v, sel, preferred_element_type=jnp.float32), 0.0)


def _relu_upsample2_flat(a, rep):
    """ReLU + nearest 2x upsample.  rep: (Hc*Wc, 4*Hc*Wc) 0/1 replication matrix."""
    return jnp.dot(jnp.maximum(a, 0.0), rep, preferred_element_type=jnp.float32)


# ---------------------------------------------------------------------------
# The single fused kernel: one grid step = one image, everything in registers.
# ---------------------------------------------------------------------------
def _net_kernel(x_ref, w1, b1, w2, b2, w3, b3, w4, b4, w5, b5,
                pool1, pool2, up3, up2, o_ref, *, H, W):
    H2, W2, H3, W3 = H // 2, W // 2, H // 4, W // 4

    # conv1(1->16) -> maxpool2 -> relu
    a = _conv3x3_flat(x_ref[0], w1[...], b1[...], H, W)           # (16, H*W)
    a = _maxpool2_relu_flat(a, pool1[...], W)                     # (16, H2*W2)

    # conv2(16->32) -> maxpool2 -> relu
    a = _conv3x3_flat(a, w2[...], b2[...], H2, W2)                # (32, H2*W2)
    a = _maxpool2_relu_flat(a, pool2[...], W2)                    # (32, H3*W3)

    # iconv3(32->16, convT rewritten as conv) -> relu -> nearest x2
    a = _conv3x3_flat(a, w3[...], b3[...], H3, W3)                # (16, H3*W3)
    a = _relu_upsample2_flat(a, up3[...])                         # (16, H2*W2)

    # iconv2(16->16) -> relu -> nearest x2
    a = _conv3x3_flat(a, w4[...], b4[...], H2, W2)                # (16, H2*W2)
    a = _relu_upsample2_flat(a, up2[...])                         # (16, H*W)

    # iconv1(16->1) -> tanh; result is already the lane-dense (1, H*W) row.
    a = _conv3x3_flat(a, w5[...], b5[...], H, W)                  # (1, H*W)
    o_ref[0] = jnp.tanh(a)


# ---------------------------------------------------------------------------
# Wrapper: NCHW in / NCHW out, single pallas_call, no scratch.
# ---------------------------------------------------------------------------
def _pool_select(Hc, Wc):
    """(Hc*Wc, Hc*Wc//4) 0/1 matrix selecting the even-(y,x) pool anchors."""
    P, Q = Hc * Wc, (Hc // 2) * (Wc // 2)
    q = jnp.arange(Q)
    src = (2 * (q // (Wc // 2))) * Wc + 2 * (q % (Wc // 2))
    return (jnp.arange(P)[:, None] == src[None, :]).astype(jnp.float32)


def _up_replicate(Hc, Wc):
    """(Hc*Wc, 4*Hc*Wc) 0/1 matrix for nearest-neighbor 2x upsampling."""
    P, Q = Hc * Wc, (2 * Hc) * (2 * Wc)
    q = jnp.arange(Q)
    src = ((q // (2 * Wc)) // 2) * Wc + (q % (2 * Wc)) // 2
    return (jnp.arange(P)[:, None] == src[None, :]).astype(jnp.float32)


@jax.jit
def net_forward(x_nchw, params):
    """Matches Net.forward. x_nchw: (N, 1, H, W) f32, H and W divisible by 4."""
    N, _, H, W = x_nchw.shape
    f32 = jnp.float32
    # Lane-dense input slab: (N, 1, H*W); no NHWC transpose, no trailing dim 1.
    x = x_nchw.reshape(N, 1, H * W).astype(f32)

    wb = [params[k] for k in
          ("w1", "b1", "w2", "b2", "w3", "b3", "w4", "b4", "w5", "b5")]
    consts = [_pool_select(H, W), _pool_select(H // 2, W // 2),
              _up_replicate(H // 4, W // 4), _up_replicate(H // 2, W // 2)]

    def full_spec(a):
        nd = a.ndim
        return pl.BlockSpec(a.shape, lambda n, _nd=nd: (0,) * _nd)

    out = pl.pallas_call(
        functools.partial(_net_kernel, H=H, W=W),
        out_shape=jax.ShapeDtypeStruct((N, 1, H * W), f32),
        grid=(N,),
        in_specs=[pl.BlockSpec((1, 1, H * W), lambda n: (n, 0, 0))]
                 + [full_spec(a) for a in wb]
                 + [full_spec(a) for a in consts],
        out_specs=pl.BlockSpec((1, 1, H * W), lambda n: (n, 0, 0)),
        compiler_params=pltpu.CompilerParams(dimension_semantics=("parallel",)),
    )(x, *wb, *consts)
    return out.reshape(N, 1, H, W)                                # NCHW


# ---------------------------------------------------------------------------
# Parameter setup (deterministic, PyTorch-like uniform init) + weight prep.
# Weights are stored as (cout, 9*cin) MXU_DTYPE matrices, columns ordered
# (ky, kx, cin); biases as (cout, 1) f32 (broadcast across lanes in-kernel).
# ---------------------------------------------------------------------------
def _uniform(key, shape, fan_in):
    bound = 1.0 / (fan_in ** 0.5)
    return jax.random.uniform(key, shape, jnp.float32, -bound, bound)


def _conv_w_to_mat(w_oihw):
    # Conv2d weight (O, I, 3, 3) -> (O, ky, kx, I) -> (O, 9*I)
    o, i, kh, kw = w_oihw.shape
    return jnp.transpose(w_oihw, (0, 2, 3, 1)).reshape(o, kh * kw * i).astype(MXU_DTYPE)


def _convT_w_to_mat(w_iohw):
    # ConvTranspose2d (I, O, 3, 3), stride=1, pad=1 == same-conv with spatially
    # flipped kernel and swapped channel axes -> (O, ky, kx, I) -> (O, 9*I)
    i, o, kh, kw = w_iohw.shape
    okki = jnp.transpose(jnp.flip(w_iohw, axis=(2, 3)), (1, 2, 3, 0))
    return okki.reshape(o, kh * kw * i).astype(MXU_DTYPE)


def init_params(key):
    ks = jax.random.split(key, 10)
    w1 = _uniform(ks[0], (16, 1, 3, 3), 1 * 9)      # conv1
    b1 = _uniform(ks[1], (16,), 1 * 9)
    w2 = _uniform(ks[2], (32, 16, 3, 3), 16 * 9)    # conv2
    b2 = _uniform(ks[3], (32,), 16 * 9)
    w3 = _uniform(ks[4], (32, 16, 3, 3), 16 * 9)    # iconv3 (in, out, kh, kw)
    b3 = _uniform(ks[5], (16,), 16 * 9)
    w4 = _uniform(ks[6], (16, 16, 3, 3), 16 * 9)    # iconv2
    b4 = _uniform(ks[7], (16,), 16 * 9)
    w5 = _uniform(ks[8], (16, 1, 3, 3), 1 * 9)      # iconv1
    b5 = _uniform(ks[9], (1,), 1 * 9)
    return {
        "w1": _conv_w_to_mat(w1),  "b1": b1.reshape(16, 1),
        "w2": _conv_w_to_mat(w2),  "b2": b2.reshape(32, 1),
        "w3": _convT_w_to_mat(w3), "b3": b3.reshape(16, 1),
        "w4": _convT_w_to_mat(w4), "b4": b4.reshape(16, 1),
        "w5": _convT_w_to_mat(w5), "b5": b5.reshape(1, 1),
    }


# ---------------------------------------------------------------------------
# Pure-XLA reference (same stored weights, f32 math) to validate the kernel.
# ---------------------------------------------------------------------------
def _ref_forward(x_nchw, params):
    f32 = jnp.float32

    def conv(x, wmat, b):
        cout, k9 = wmat.shape
        cin = k9 // 9
        w = wmat.astype(f32).reshape(cout, 3, 3, cin).transpose(0, 3, 1, 2)  # OIHW
        y = jax.lax.conv_general_dilated(
            x, w, (1, 1), ((1, 1), (1, 1)),
            dimension_numbers=("NCHW", "OIHW", "NCHW"))
        return y + b.astype(f32).reshape(1, cout, 1, 1)

    def pool(x):
        return jax.lax.reduce_window(x, -jnp.inf, jax.lax.max,
                                     (1, 1, 2, 2), (1, 1, 2, 2), "VALID")

    def up(x):
        return jnp.repeat(jnp.repeat(x, 2, axis=2), 2, axis=3)

    relu = lambda t: jnp.maximum(t, 0.0)
    a = relu(pool(conv(x_nchw, params["w1"], params["b1"])))
    a = relu(pool(conv(a, params["w2"], params["b2"])))
    a = relu(up(conv(a, params["w3"], params["b3"])))
    a = relu(up(conv(a, params["w4"], params["b4"])))
    return jnp.tanh(conv(a, params["w5"], params["b5"]))


if __name__ == "__main__":
    key = jax.random.PRNGKey(0)
    pkey, xkey = jax.random.split(key)
    params = init_params(pkey)
    x = jax.random.normal(xkey, (2, 1, 16, 16), jnp.float32)      # NCHW like PyTorch
    y = net_forward(x, params)
    jax.block_until_ready(y)
    assert y.shape == (2, 1, 16, 16)
    assert bool(jnp.all(jnp.isfinite(y)))
    assert bool(jnp.all(jnp.abs(y) <= 1.0))                       # tanh output range
    # Validate against the pure-XLA reference; the only numerical difference is
    # the bf16 rounding of the MXU patch operands (accumulation is f32).
    y_ref = _ref_forward(x, params)
    err = float(jnp.max(jnp.abs(y - y_ref)))
    assert err < 5e-2, f"max abs error vs reference: {err}"
    print("KERNEL_OK")
</pallas_src>

<mosaic_0001>
module attributes {stable_mosaic.version = 11 : i64} {
  func.func @_net_kernel(%arg0: i32, %arg1: memref<1x1x256xf32, #tpu.memory_space<vmem>>, %arg2: memref<16x9xbf16, #tpu.memory_space<vmem>>, %arg3: memref<16x1xf32, #tpu.memory_space<vmem>>, %arg4: memref<32x144xbf16, #tpu.memory_space<vmem>>, %arg5: memref<32x1xf32, #tpu.memory_space<vmem>>, %arg6: memref<16x288xbf16, #tpu.memory_space<vmem>>, %arg7: memref<16x1xf32, #tpu.memory_space<vmem>>, %arg8: memref<16x144xbf16, #tpu.memory_space<vmem>>, %arg9: memref<16x1xf32, #tpu.memory_space<vmem>>, %arg10: memref<1x144xbf16, #tpu.memory_space<vmem>>, %arg11: memref<1x1xf32, #tpu.memory_space<vmem>>, %arg12: memref<256x64xf32, #tpu.memory_space<vmem>>, %arg13: memref<64x16xf32, #tpu.memory_space<vmem>>, %arg14: memref<16x64xf32, #tpu.memory_space<vmem>>, %arg15: memref<64x256xf32, #tpu.memory_space<vmem>>, %arg16: memref<1x1x256xf32, #tpu.memory_space<vmem>>) attributes {dimension_semantics = [#tpu.dimension_semantics<parallel>], iteration_bounds = array<i64: 2>, scalar_prefetch = 0 : i64, scratch_operands = 0 : i64, tpu.core_type = #tpu.core_type<tc>, window_params = [{transform_indices = @transform_0, window_bounds = array<i64: 1, 1, 256>}, {pipeline_mode = #tpu.pipeline_mode<synchronous>, transform_indices = @transform_1, window_bounds = array<i64: 16, 9>}, {pipeline_mode = #tpu.pipeline_mode<synchronous>, transform_indices = @transform_2, window_bounds = array<i64: 16, 1>}, {pipeline_mode = #tpu.pipeline_mode<synchronous>, transform_indices = @transform_3, window_bounds = array<i64: 32, 144>}, {pipeline_mode = #tpu.pipeline_mode<synchronous>, transform_indices = @transform_4, window_bounds = array<i64: 32, 1>}, {pipeline_mode = #tpu.pipeline_mode<synchronous>, transform_indices = @transform_5, window_bounds = array<i64: 16, 288>}, {pipeline_mode = #tpu.pipeline_mode<synchronous>, transform_indices = @transform_6, window_bounds = array<i64: 16, 1>}, {pipeline_mode = #tpu.pipeline_mode<synchronous>, transform_indices = @transform_7, window_bounds = array<i64: 16, 144>}, {pipeline_mode = #tpu.pipeline_mode<synchronous>, transform_indices = @transform_8, window_bounds = array<i64: 16, 1>}, {pipeline_mode = #tpu.pipeline_mode<synchronous>, transform_indices = @transform_9, window_bounds = array<i64: 1, 144>}, {pipeline_mode = #tpu.pipeline_mode<synchronous>, transform_indices = @transform_10, window_bounds = array<i64: 1, 1>}, {pipeline_mode = #tpu.pipeline_mode<synchronous>, transform_indices = @transform_11, window_bounds = array<i64: 256, 64>}, {pipeline_mode = #tpu.pipeline_mode<synchronous>, transform_indices = @transform_12, window_bounds = array<i64: 64, 16>}, {pipeline_mode = #tpu.pipeline_mode<synchronous>, transform_indices = @transform_13, window_bounds = array<i64: 16, 64>}, {pipeline_mode = #tpu.pipeline_mode<synchronous>, transform_indices = @transform_14, window_bounds = array<i64: 64, 256>}, {transform_indices = @transform_15, window_bounds = array<i64: 1, 1, 256>}]} {
    %c0 = arith.constant 0 : index
    %c0_0 = arith.constant 0 : index
    %c0_1 = arith.constant 0 : index
    %0 = vector.load %arg1[%c0, %c0_0, %c0_1] : memref<1x1x256xf32, #tpu.memory_space<vmem>>, vector<1x1x256xf32>
    %1 = vector.shape_cast %0 : vector<1x1x256xf32> to vector<1x256xf32>
    %c0_2 = arith.constant 0 : index
    %c0_3 = arith.constant 0 : index
    %2 = vector.load %arg2[%c0_2, %c0_3] : memref<16x9xbf16, #tpu.memory_space<vmem>>, vector<16x9xbf16>
    %c0_4 = arith.constant 0 : index
    %c0_5 = arith.constant 0 : index
    %3 = vector.load %arg3[%c0_4, %c0_5] : memref<16x1xf32, #tpu.memory_space<vmem>>, vector<16x1xf32>
    %4 = tpu.iota {dimensions = array<i32: 1>} : vector<1x256xi32>
    %c16_i32 = arith.constant 16 : i32
    %c0_i32 = arith.constant 0 : i32
    %5 = arith.cmpi eq, %c16_i32, %c0_i32 : i32
    %c1_i32 = arith.constant 1 : i32
    %6 = arith.select %5, %c1_i32, %c16_i32 : i32
    %7 = vector.broadcast %6 : i32 to vector<1x256xi32>
    %8 = arith.remsi %4, %7 : vector<1x256xi32>
    %c0_i32_6 = arith.constant 0 : i32
    %9 = vector.broadcast %c0_i32_6 : i32 to vector<1x256xi32>
    %10 = arith.cmpi ne, %8, %9 : vector<1x256xi32>
    %c0_i32_7 = arith.constant 0 : i32
    %11 = vector.broadcast %c0_i32_7 : i32 to vector<1x256xi32>
    %12 = arith.cmpi slt, %8, %11 : vector<1x256xi32>
    %c0_i32_8 = arith.constant 0 : i32
    %13 = arith.cmpi slt, %6, %c0_i32_8 : i32
    %14 = vector.broadcast %13 : i1 to vector<1x256xi1>
    %15 = vector.broadcast %14 : vector<1x256xi1> to vector<1x256xi1>
    %16 = arith.xori %12, %15 : vector<1x256xi1>
    %17 = arith.andi %16, %10 : vector<1x256xi1>
    %18 = vector.broadcast %6 : i32 to vector<1x256xi32>
    %19 = arith.addi %8, %18 : vector<1x256xi32>
    %20 = arith.select %17, %19, %8 : vector<1x256xi1>, vector<1x256xi32>
    %c0_i32_9 = arith.constant 0 : i32
    %21 = vector.broadcast %c0_i32_9 : i32 to vector<1x256xi32>
    %22 = arith.cmpi sgt, %20, %21 : vector<1x256xi32>
    %c15_i32 = arith.constant 15 : i32
    %23 = vector.broadcast %c15_i32 : i32 to vector<1x256xi32>
    %24 = arith.cmpi slt, %20, %23 : vector<1x256xi32>
    %cst = arith.constant 0.000000e+00 : f32
    %25 = vector.broadcast %cst : f32 to vector<1x1xf32>
    %cst_10 = arith.constant 0.000000e+00 : f32
    %26 = vector.broadcast %cst_10 : f32 to vector<1x16xf32>
    %27 = vector.extract_strided_slice %1 {offsets = [0, 0], sizes = [1, 255], strides = [1, 1]} : vector<1x256xf32> to vector<1x255xf32>
    %28 = tpu.concatenate %25, %27 in 1 : vector<1x1xf32>, vector<1x255xf32> -> vector<1x256xf32>
    %cst_11 = arith.constant 0.000000e+00 : f32
    %29 = vector.broadcast %cst_11 : f32 to vector<1x256xf32>
    %30 = arith.select %22, %28, %29 : vector<1x256xi1>, vector<1x256xf32>
    %31 = vector.extract_strided_slice %1 {offsets = [0, 1], sizes = [1, 255], strides = [1, 1]} : vector<1x256xf32> to vector<1x255xf32>
    %32 = tpu.concatenate %31, %25 in 1 : vector<1x255xf32>, vector<1x1xf32> -> vector<1x256xf32>
    %cst_12 = arith.constant 0.000000e+00 : f32
    %33 = vector.broadcast %cst_12 : f32 to vector<1x256xf32>
    %34 = arith.select %24, %32, %33 : vector<1x256xi1>, vector<1x256xf32>
    %35 = vector.extract_strided_slice %30 {offsets = [0, 0], sizes = [1, 240], strides = [1, 1]} : vector<1x256xf32> to vector<1x240xf32>
    %36 = tpu.concatenate %26, %35 in 1 : vector<1x16xf32>, vector<1x240xf32> -> vector<1x256xf32>
    %37 = vector.extract_strided_slice %1 {offsets = [0, 0], sizes = [1, 240], strides = [1, 1]} : vector<1x256xf32> to vector<1x240xf32>
    %38 = tpu.concatenate %26, %37 in 1 : vector<1x16xf32>, vector<1x240xf32> -> vector<1x256xf32>
    %39 = vector.extract_strided_slice %34 {offsets = [0, 0], sizes = [1, 240], strides = [1, 1]} : vector<1x256xf32> to vector<1x240xf32>
    %40 = tpu.concatenate %26, %39 in 1 : vector<1x16xf32>, vector<1x240xf32> -> vector<1x256xf32>
    %41 = vector.extract_strided_slice %30 {offsets = [0, 16], sizes = [1, 240], strides = [1, 1]} : vector<1x256xf32> to vector<1x240xf32>
    %42 = tpu.concatenate %41, %26 in 1 : vector<1x240xf32>, vector<1x16xf32> -> vector<1x256xf32>
    %43 = vector.extract_strided_slice %1 {offsets = [0, 16], sizes = [1, 240], strides = [1, 1]} : vector<1x256xf32> to vector<1x240xf32>
    %44 = tpu.concatenate %43, %26 in 1 : vector<1x240xf32>, vector<1x16xf32> -> vector<1x256xf32>
    %45 = vector.extract_strided_slice %34 {offsets = [0, 16], sizes = [1, 240], strides = [1, 1]} : vector<1x256xf32> to vector<1x240xf32>
    %46 = tpu.concatenate %45, %26 in 1 : vector<1x240xf32>, vector<1x16xf32> -> vector<1x256xf32>
    %47 = tpu.concatenate %36, %38, %40, %30, %1, %34, %42, %44, %46 in 0 : vector<1x256xf32>, vector<1x256xf32>, vector<1x256xf32>, vector<1x256xf32>, vector<1x256xf32>, vector<1x256xf32>, vector<1x256xf32>, vector<1x256xf32>, vector<1x256xf32> -> vector<9x256xf32>
    %48 = arith.truncf %47 : vector<9x256xf32> to vector<9x256xbf16>
    %cst_13 = arith.constant dense<0.000000e+00> : vector<16x256xf32>
    %49 = tpu.matmul %2, %48, %cst_13 {dimension_numbers = #tpu.dot_dimension_numbers<[1], [0], [0], [1], [0, 0, 1, 1], [], []>} : vector<16x9xbf16>, vector<9x256xbf16>, vector<16x256xf32> -> vector<16x256xf32>
    %50 = vector.broadcast %3 : vector<16x1xf32> to vector<16x256xf32>
    %51 = arith.addf %49, %50 : vector<16x256xf32>
    %c0_14 = arith.constant 0 : index
    %c0_15 = arith.constant 0 : index
    %52 = vector.load %arg12[%c0_14, %c0_15] : memref<256x64xf32, #tpu.memory_space<vmem>>, vector<256x64xf32>
    %cst_16 = arith.constant 0.000000e+00 : f32
    %53 = vector.broadcast %cst_16 : f32 to vector<16x1xf32>
    %cst_17 = arith.constant 0.000000e+00 : f32
    %54 = vector.broadcast %cst_17 : f32 to vector<16x16xf32>
    %55 = vector.extract_strided_slice %51 {offsets = [0, 1], sizes = [16, 255], strides = [1, 1]} : vector<16x256xf32> to vector<16x255xf32>
    %56 = tpu.concatenate %55, %53 in 1 : vector<16x255xf32>, vector<16x1xf32> -> vector<16x256xf32>
    %57 = arith.maximumf %51, %56 : vector<16x256xf32>
    %58 = vector.extract_strided_slice %57 {offsets = [0, 16], sizes = [16, 240], strides = [1, 1]} : vector<16x256xf32> to vector<16x240xf32>
    %59 = tpu.concatenate %58, %54 in 1 : vector<16x240xf32>, vector<16x16xf32> -> vector<16x256xf32>
    %60 = arith.maximumf %57, %59 : vector<16x256xf32>
    %cst_18 = arith.constant dense<0.000000e+00> : vector<16x64xf32>
    %61 = tpu.matmul %60, %52, %cst_18 {dimension_numbers = #tpu.dot_dimension_numbers<[1], [0], [0], [1], [0, 0, 1, 1], [], []>} : vector<16x256xf32>, vector<256x64xf32>, vector<16x64xf32> -> vector<16x64xf32>
    %cst_19 = arith.constant 0.000000e+00 : f32
    %62 = vector.broadcast %cst_19 : f32 to vector<16x64xf32>
    %63 = arith.maximumf %61, %62 : vector<16x64xf32>
    %c0_20 = arith.constant 0 : index
    %c0_21 = arith.constant 0 : index
    %64 = vector.load %arg4[%c0_20, %c0_21] : memref<32x144xbf16, #tpu.memory_space<vmem>>, vector<32x144xbf16>
    %c0_22 = arith.constant 0 : index
    %c0_23 = arith.constant 0 : index
    %65 = vector.load %arg5[%c0_22, %c0_23] : memref<32x1xf32, #tpu.memory_space<vmem>>, vector<32x1xf32>
    %66 = tpu.iota {dimensions = array<i32: 1>} : vector<1x64xi32>
    %c8_i32 = arith.constant 8 : i32
    %c0_i32_24 = arith.constant 0 : i32
    %67 = arith.cmpi eq, %c8_i32, %c0_i32_24 : i32
    %c1_i32_25 = arith.constant 1 : i32
    %68 = arith.select %67, %c1_i32_25, %c8_i32 : i32
    %69 = vector.broadcast %68 : i32 to vector<1x64xi32>
    %70 = arith.remsi %66, %69 : vector<1x64xi32>
    %c0_i32_26 = arith.constant 0 : i32
    %71 = vector.broadcast %c0_i32_26 : i32 to vector<1x64xi32>
    %72 = arith.cmpi ne, %70, %71 : vector<1x64xi32>
    %c0_i32_27 = arith.constant 0 : i32
    %73 = vector.broadcast %c0_i32_27 : i32 to vector<1x64xi32>
    %74 = arith.cmpi slt, %70, %73 : vector<1x64xi32>
    %c0_i32_28 = arith.constant 0 : i32
    %75 = arith.cmpi slt, %68, %c0_i32_28 : i32
    %76 = vector.broadcast %75 : i1 to vector<1x64xi1>
    %77 = vector.broadcast %76 : vector<1x64xi1> to vector<1x64xi1>
    %78 = arith.xori %74, %77 : vector<1x64xi1>
    %79 = arith.andi %78, %72 : vector<1x64xi1>
    %80 = vector.broadcast %68 : i32 to vector<1x64xi32>
    %81 = arith.addi %70, %80 : vector<1x64xi32>
    %82 = arith.select %79, %81, %70 : vector<1x64xi1>, vector<1x64xi32>
    %c0_i32_29 = arith.constant 0 : i32
    %83 = vector.broadcast %c0_i32_29 : i32 to vector<1x64xi32>
    %84 = arith.cmpi sgt, %82, %83 : vector<1x64xi32>
    %c7_i32 = arith.constant 7 : i32
    %85 = vector.broadcast %c7_i32 : i32 to vector<1x64xi32>
    %86 = arith.cmpi slt, %82, %85 : vector<1x64xi32>
    %cst_30 = arith.constant 0.000000e+00 : f32
    %87 = vector.broadcast %cst_30 : f32 to vector<16x1xf32>
    %cst_31 = arith.constant 0.000000e+00 : f32
    %88 = vector.broadcast %cst_31 : f32 to vector<16x8xf32>
    %89 = vector.extract_strided_slice %63 {offsets = [0, 0], sizes = [16, 63], strides = [1, 1]} : vector<16x64xf32> to vector<16x63xf32>
    %90 = tpu.concatenate %87, %89 in 1 : vector<16x1xf32>, vector<16x63xf32> -> vector<16x64xf32>
    %cst_32 = arith.constant 0.000000e+00 : f32
    %91 = vector.shape_cast %84 : vector<1x64xi1> to vector<1x64xi1>
    %92 = vector.broadcast %91 : vector<1x64xi1> to vector<16x64xi1>
    %93 = vector.broadcast %cst_32 : f32 to vector<16x64xf32>
    %94 = arith.select %92, %90, %93 : vector<16x64xi1>, vector<16x64xf32>
    %95 = vector.extract_strided_slice %63 {offsets = [0, 1], sizes = [16, 63], strides = [1, 1]} : vector<16x64xf32> to vector<16x63xf32>
    %96 = tpu.concatenate %95, %87 in 1 : vector<16x63xf32>, vector<16x1xf32> -> vector<16x64xf32>
    %cst_33 = arith.constant 0.000000e+00 : f32
    %97 = vector.shape_cast %86 : vector<1x64xi1> to vector<1x64xi1>
    %98 = vector.broadcast %97 : vector<1x64xi1> to vector<16x64xi1>
    %99 = vector.broadcast %cst_33 : f32 to vector<16x64xf32>
    %100 = arith.select %98, %96, %99 : vector<16x64xi1>, vector<16x64xf32>
    %101 = vector.extract_strided_slice %94 {offsets = [0, 0], sizes = [16, 56], strides = [1, 1]} : vector<16x64xf32> to vector<16x56xf32>
    %102 = tpu.concatenate %88, %101 in 1 : vector<16x8xf32>, vector<16x56xf32> -> vector<16x64xf32>
    %103 = vector.extract_strided_slice %63 {offsets = [0, 0], sizes = [16, 56], strides = [1, 1]} : vector<16x64xf32> to vector<16x56xf32>
    %104 = tpu.concatenate %88, %103 in 1 : vector<16x8xf32>, vector<16x56xf32> -> vector<16x64xf32>
    %105 = vector.extract_strided_slice %100 {offsets = [0, 0], sizes = [16, 56], strides = [1, 1]} : vector<16x64xf32> to vector<16x56xf32>
    %106 = tpu.concatenate %88, %105 in 1 : vector<16x8xf32>, vector<16x56xf32> -> vector<16x64xf32>
    %107 = vector.extract_strided_slice %94 {offsets = [0, 8], sizes = [16, 56], strides = [1, 1]} : vector<16x64xf32> to vector<16x56xf32>
    %108 = tpu.concatenate %107, %88 in 1 : vector<16x56xf32>, vector<16x8xf32> -> vector<16x64xf32>
    %109 = vector.extract_strided_slice %63 {offsets = [0, 8], sizes = [16, 56], strides = [1, 1]} : vector<16x64xf32> to vector<16x56xf32>
    %110 = tpu.concatenate %109, %88 in 1 : vector<16x56xf32>, vector<16x8xf32> -> vector<16x64xf32>
    %111 = vector.extract_strided_slice %100 {offsets = [0, 8], sizes = [16, 56], strides = [1, 1]} : vector<16x64xf32> to vector<16x56xf32>
    %112 = tpu.concatenate %111, %88 in 1 : vector<16x56xf32>, vector<16x8xf32> -> vector<16x64xf32>
    %113 = tpu.concatenate %102, %104, %106, %94, %63, %100, %108, %110, %112 in 0 : vector<16x64xf32>, vector<16x64xf32>, vector<16x64xf32>, vector<16x64xf32>, vector<16x64xf32>, vector<16x64xf32>, vector<16x64xf32>, vector<16x64xf32>, vector<16x64xf32> -> vector<144x64xf32>
    %114 = arith.truncf %113 : vector<144x64xf32> to vector<144x64xbf16>
    %cst_34 = arith.constant dense<0.000000e+00> : vector<32x64xf32>
    %115 = tpu.matmul %64, %114, %cst_34 {dimension_numbers = #tpu.dot_dimension_numbers<[1], [0], [0], [1], [0, 0, 1, 1], [], []>} : vector<32x144xbf16>, vector<144x64xbf16>, vector<32x64xf32> -> vector<32x64xf32>
    %116 = vector.broadcast %65 : vector<32x1xf32> to vector<32x64xf32>
    %117 = arith.addf %115, %116 : vector<32x64xf32>
    %c0_35 = arith.constant 0 : index
    %c0_36 = arith.constant 0 : index
    %118 = vector.load %arg13[%c0_35, %c0_36] : memref<64x16xf32, #tpu.memory_space<vmem>>, vector<64x16xf32>
    %cst_37 = arith.constant 0.000000e+00 : f32
    %119 = vector.broadcast %cst_37 : f32 to vector<32x1xf32>
    %cst_38 = arith.constant 0.000000e+00 : f32
    %120 = vector.broadcast %cst_38 : f32 to vector<32x8xf32>
    %121 = vector.extract_strided_slice %117 {offsets = [0, 1], sizes = [32, 63], strides = [1, 1]} : vector<32x64xf32> to vector<32x63xf32>
    %122 = tpu.concatenate %121, %119 in 1 : vector<32x63xf32>, vector<32x1xf32> -> vector<32x64xf32>
    %123 = arith.maximumf %117, %122 : vector<32x64xf32>
    %124 = vector.extract_strided_slice %123 {offsets = [0, 8], sizes = [32, 56], strides = [1, 1]} : vector<32x64xf32> to vector<32x56xf32>
    %125 = tpu.concatenate %124, %120 in 1 : vector<32x56xf32>, vector<32x8xf32> -> vector<32x64xf32>
    %126 = arith.maximumf %123, %125 : vector<32x64xf32>
    %cst_39 = arith.constant dense<0.000000e+00> : vector<32x16xf32>
    %127 = tpu.matmul %126, %118, %cst_39 {dimension_numbers = #tpu.dot_dimension_numbers<[1], [0], [0], [1], [0, 0, 1, 1], [], []>} : vector<32x64xf32>, vector<64x16xf32>, vector<32x16xf32> -> vector<32x16xf32>
    %cst_40 = arith.constant 0.000000e+00 : f32
    %128 = vector.broadcast %cst_40 : f32 to vector<32x16xf32>
    %129 = arith.maximumf %127, %128 : vector<32x16xf32>
    %c0_41 = arith.constant 0 : index
    %c0_42 = arith.constant 0 : index
    %130 = vector.load %arg6[%c0_41, %c0_42] : memref<16x288xbf16, #tpu.memory_space<vmem>>, vector<16x288xbf16>
    %c0_43 = arith.constant 0 : index
    %c0_44 = arith.constant 0 : index
    %131 = vector.load %arg7[%c0_43, %c0_44] : memref<16x1xf32, #tpu.memory_space<vmem>>, vector<16x1xf32>
    %132 = tpu.iota {dimensions = array<i32: 1>} : vector<1x16xi32>
    %c4_i32 = arith.constant 4 : i32
    %c0_i32_45 = arith.constant 0 : i32
    %133 = arith.cmpi eq, %c4_i32, %c0_i32_45 : i32
    %c1_i32_46 = arith.constant 1 : i32
    %134 = arith.select %133, %c1_i32_46, %c4_i32 : i32
    %135 = vector.broadcast %134 : i32 to vector<1x16xi32>
    %136 = arith.remsi %132, %135 : vector<1x16xi32>
    %c0_i32_47 = arith.constant 0 : i32
    %137 = vector.broadcast %c0_i32_47 : i32 to vector<1x16xi32>
    %138 = arith.cmpi ne, %136, %137 : vector<1x16xi32>
    %c0_i32_48 = arith.constant 0 : i32
    %139 = vector.broadcast %c0_i32_48 : i32 to vector<1x16xi32>
    %140 = arith.cmpi slt, %136, %139 : vector<1x16xi32>
    %c0_i32_49 = arith.constant 0 : i32
    %141 = arith.cmpi slt, %134, %c0_i32_49 : i32
    %142 = vector.broadcast %141 : i1 to vector<1x16xi1>
    %143 = vector.broadcast %142 : vector<1x16xi1> to vector<1x16xi1>
    %144 = arith.xori %140, %143 : vector<1x16xi1>
    %145 = arith.andi %144, %138 : vector<1x16xi1>
    %146 = vector.broadcast %134 : i32 to vector<1x16xi32>
    %147 = arith.addi %136, %146 : vector<1x16xi32>
    %148 = arith.select %145, %147, %136 : vector<1x16xi1>, vector<1x16xi32>
    %c0_i32_50 = arith.constant 0 : i32
    %149 = vector.broadcast %c0_i32_50 : i32 to vector<1x16xi32>
    %150 = arith.cmpi sgt, %148, %149 : vector<1x16xi32>
    %c3_i32 = arith.constant 3 : i32
    %151 = vector.broadcast %c3_i32 : i32 to vector<1x16xi32>
    %152 = arith.cmpi slt, %148, %151 : vector<1x16xi32>
    %cst_51 = arith.constant 0.000000e+00 : f32
    %153 = vector.broadcast %cst_51 : f32 to vector<32x1xf32>
    %cst_52 = arith.constant 0.000000e+00 : f32
    %154 = vector.broadcast %cst_52 : f32 to vector<32x4xf32>
    %155 = vector.extract_strided_slice %129 {offsets = [0, 0], sizes = [32, 15], strides = [1, 1]} : vector<32x16xf32> to vector<32x15xf32>
    %156 = tpu.concatenate %153, %155 in 1 : vector<32x1xf32>, vector<32x15xf32> -> vector<32x16xf32>
    %cst_53 = arith.constant 0.000000e+00 : f32
    %157 = vector.shape_cast %150 : vector<1x16xi1> to vector<1x16xi1>
    %158 = vector.broadcast %157 : vector<1x16xi1> to vector<32x16xi1>
    %159 = vector.broadcast %cst_53 : f32 to vector<32x16xf32>
    %160 = arith.select %158, %156, %159 : vector<32x16xi1>, vector<32x16xf32>
    %161 = vector.extract_strided_slice %129 {offsets = [0, 1], sizes = [32, 15], strides = [1, 1]} : vector<32x16xf32> to vector<32x15xf32>
    %162 = tpu.concatenate %161, %153 in 1 : vector<32x15xf32>, vector<32x1xf32> -> vector<32x16xf32>
    %cst_54 = arith.constant 0.000000e+00 : f32
    %163 = vector.shape_cast %152 : vector<1x16xi1> to vector<1x16xi1>
    %164 = vector.broadcast %163 : vector<1x16xi1> to vector<32x16xi1>
    %165 = vector.broadcast %cst_54 : f32 to vector<32x16xf32>
    %166 = arith.select %164, %162, %165 : vector<32x16xi1>, vector<32x16xf32>
    %167 = vector.extract_strided_slice %160 {offsets = [0, 0], sizes = [32, 12], strides = [1, 1]} : vector<32x16xf32> to vector<32x12xf32>
    %168 = tpu.concatenate %154, %167 in 1 : vector<32x4xf32>, vector<32x12xf32> -> vector<32x16xf32>
    %169 = vector.extract_strided_slice %129 {offsets = [0, 0], sizes = [32, 12], strides = [1, 1]} : vector<32x16xf32> to vector<32x12xf32>
    %170 = tpu.concatenate %154, %169 in 1 : vector<32x4xf32>, vector<32x12xf32> -> vector<32x16xf32>
    %171 = vector.extract_strided_slice %166 {offsets = [0, 0], sizes = [32, 12], strides = [1, 1]} : vector<32x16xf32> to vector<32x12xf32>
    %172 = tpu.concatenate %154, %171 in 1 : vector<32x4xf32>, vector<32x12xf32> -> vector<32x16xf32>
    %173 = vector.extract_strided_slice %160 {offsets = [0, 4], sizes = [32, 12], strides = [1, 1]} : vector<32x16xf32> to vector<32x12xf32>
    %174 = tpu.concatenate %173, %154 in 1 : vector<32x12xf32>, vector<32x4xf32> -> vector<32x16xf32>
    %175 = vector.extract_strided_slice %129 {offsets = [0, 4], sizes = [32, 12], strides = [1, 1]} : vector<32x16xf32> to vector<32x12xf32>
    %176 = tpu.concatenate %175, %154 in 1 : vector<32x12xf32>, vector<32x4xf32> -> vector<32x16xf32>
    %177 = vector.extract_strided_slice %166 {offsets = [0, 4], sizes = [32, 12], strides = [1, 1]} : vector<32x16xf32> to vector<32x12xf32>
    %178 = tpu.concatenate %177, %154 in 1 : vector<32x12xf32>, vector<32x4xf32> -> vector<32x16xf32>
    %179 = tpu.concatenate %168, %170, %172, %160, %129, %166, %174, %176, %178 in 0 : vector<32x16xf32>, vector<32x16xf32>, vector<32x16xf32>, vector<32x16xf32>, vector<32x16xf32>, vector<32x16xf32>, vector<32x16xf32>, vector<32x16xf32>, vector<32x16xf32> -> vector<288x16xf32>
    %180 = arith.truncf %179 : vector<288x16xf32> to vector<288x16xbf16>
    %cst_55 = arith.constant dense<0.000000e+00> : vector<16x16xf32>
    %181 = tpu.matmul %130, %180, %cst_55 {dimension_numbers = #tpu.dot_dimension_numbers<[1], [0], [0], [1], [0, 0, 1, 1], [], []>} : vector<16x288xbf16>, vector<288x16xbf16>, vector<16x16xf32> -> vector<16x16xf32>
    %182 = vector.broadcast %131 : vector<16x1xf32> to vector<16x16xf32>
    %183 = arith.addf %181, %182 : vector<16x16xf32>
    %c0_56 = arith.constant 0 : index
    %c0_57 = arith.constant 0 : index
    %184 = vector.load %arg14[%c0_56, %c0_57] : memref<16x64xf32, #tpu.memory_space<vmem>>, vector<16x64xf32>
    %cst_58 = arith.constant 0.000000e+00 : f32
    %185 = vector.broadcast %cst_58 : f32 to vector<16x16xf32>
    %186 = arith.maximumf %183, %185 : vector<16x16xf32>
    %cst_59 = arith.constant dense<0.000000e+00> : vector<16x64xf32>
    %187 = tpu.matmul %186, %184, %cst_59 {dimension_numbers = #tpu.dot_dimension_numbers<[1], [0], [0], [1], [0, 0, 1, 1], [], []>} : vector<16x16xf32>, vector<16x64xf32>, vector<16x64xf32> -> vector<16x64xf32>
    %c0_60 = arith.constant 0 : index
    %c0_61 = arith.constant 0 : index
    %188 = vector.load %arg8[%c0_60, %c0_61] : memref<16x144xbf16, #tpu.memory_space<vmem>>, vector<16x144xbf16>
    %c0_62 = arith.constant 0 : index
    %c0_63 = arith.constant 0 : index
    %189 = vector.load %arg9[%c0_62, %c0_63] : memref<16x1xf32, #tpu.memory_space<vmem>>, vector<16x1xf32>
    %190 = tpu.iota {dimensions = array<i32: 1>} : vector<1x64xi32>
    %c8_i32_64 = arith.constant 8 : i32
    %c0_i32_65 = arith.constant 0 : i32
    %191 = arith.cmpi eq, %c8_i32_64, %c0_i32_65 : i32
    %c1_i32_66 = arith.constant 1 : i32
    %192 = arith.select %191, %c1_i32_66, %c8_i32_64 : i32
    %193 = vector.broadcast %192 : i32 to vector<1x64xi32>
    %194 = arith.remsi %190, %193 : vector<1x64xi32>
    %c0_i32_67 = arith.constant 0 : i32
    %195 = vector.broadcast %c0_i32_67 : i32 to vector<1x64xi32>
    %196 = arith.cmpi ne, %194, %195 : vector<1x64xi32>
    %c0_i32_68 = arith.constant 0 : i32
    %197 = vector.broadcast %c0_i32_68 : i32 to vector<1x64xi32>
    %198 = arith.cmpi slt, %194, %197 : vector<1x64xi32>
    %c0_i32_69 = arith.constant 0 : i32
    %199 = arith.cmpi slt, %192, %c0_i32_69 : i32
    %200 = vector.broadcast %199 : i1 to vector<1x64xi1>
    %201 = vector.broadcast %200 : vector<1x64xi1> to vector<1x64xi1>
    %202 = arith.xori %198, %201 : vector<1x64xi1>
    %203 = arith.andi %202, %196 : vector<1x64xi1>
    %204 = vector.broadcast %192 : i32 to vector<1x64xi32>
    %205 = arith.addi %194, %204 : vector<1x64xi32>
    %206 = arith.select %203, %205, %194 : vector<1x64xi1>, vector<1x64xi32>
    %c0_i32_70 = arith.constant 0 : i32
    %207 = vector.broadcast %c0_i32_70 : i32 to vector<1x64xi32>
    %208 = arith.cmpi sgt, %206, %207 : vector<1x64xi32>
    %c7_i32_71 = arith.constant 7 : i32
    %209 = vector.broadcast %c7_i32_71 : i32 to vector<1x64xi32>
    %210 = arith.cmpi slt, %206, %209 : vector<1x64xi32>
    %cst_72 = arith.constant 0.000000e+00 : f32
    %211 = vector.broadcast %cst_72 : f32 to vector<16x1xf32>
    %cst_73 = arith.constant 0.000000e+00 : f32
    %212 = vector.broadcast %cst_73 : f32 to vector<16x8xf32>
    %213 = vector.extract_strided_slice %187 {offsets = [0, 0], sizes = [16, 63], strides = [1, 1]} : vector<16x64xf32> to vector<16x63xf32>
    %214 = tpu.concatenate %211, %213 in 1 : vector<16x1xf32>, vector<16x63xf32> -> vector<16x64xf32>
    %cst_74 = arith.constant 0.000000e+00 : f32
    %215 = vector.shape_cast %208 : vector<1x64xi1> to vector<1x64xi1>
    %216 = vector.broadcast %215 : vector<1x64xi1> to vector<16x64xi1>
    %217 = vector.broadcast %cst_74 : f32 to vector<16x64xf32>
    %218 = arith.select %216, %214, %217 : vector<16x64xi1>, vector<16x64xf32>
    %219 = vector.extract_strided_slice %187 {offsets = [0, 1], sizes = [16, 63], strides = [1, 1]} : vector<16x64xf32> to vector<16x63xf32>
    %220 = tpu.concatenate %219, %211 in 1 : vector<16x63xf32>, vector<16x1xf32> -> vector<16x64xf32>
    %cst_75 = arith.constant 0.000000e+00 : f32
    %221 = vector.shape_cast %210 : vector<1x64xi1> to vector<1x64xi1>
    %222 = vector.broadcast %221 : vector<1x64xi1> to vector<16x64xi1>
    %223 = vector.broadcast %cst_75 : f32 to vector<16x64xf32>
    %224 = arith.select %222, %220, %223 : vector<16x64xi1>, vector<16x64xf32>
    %225 = vector.extract_strided_slice %218 {offsets = [0, 0], sizes = [16, 56], strides = [1, 1]} : vector<16x64xf32> to vector<16x56xf32>
    %226 = tpu.concatenate %212, %225 in 1 : vector<16x8xf32>, vector<16x56xf32> -> vector<16x64xf32>
    %227 = vector.extract_strided_slice %187 {offsets = [0, 0], sizes = [16, 56], strides = [1, 1]} : vector<16x64xf32> to vector<16x56xf32>
    %228 = tpu.concatenate %212, %227 in 1 : vector<16x8xf32>, vector<16x56xf32> -> vector<16x64xf32>
    %229 = vector.extract_strided_slice %224 {offsets = [0, 0], sizes = [16, 56], strides = [1, 1]} : vector<16x64xf32> to vector<16x56xf32>
    %230 = tpu.concatenate %212, %229 in 1 : vector<16x8xf32>, vector<16x56xf32> -> vector<16x64xf32>
    %231 = vector.extract_strided_slice %218 {offsets = [0, 8], sizes = [16, 56], strides = [1, 1]} : vector<16x64xf32> to vector<16x56xf32>
    %232 = tpu.concatenate %231, %212 in 1 : vector<16x56xf32>, vector<16x8xf32> -> vector<16x64xf32>
    %233 = vector.extract_strided_slice %187 {offsets = [0, 8], sizes = [16, 56], strides = [1, 1]} : vector<16x64xf32> to vector<16x56xf32>
    %234 = tpu.concatenate %233, %212 in 1 : vector<16x56xf32>, vector<16x8xf32> -> vector<16x64xf32>
    %235 = vector.extract_strided_slice %224 {offsets = [0, 8], sizes = [16, 56], strides = [1, 1]} : vector<16x64xf32> to vector<16x56xf32>
    %236 = tpu.concatenate %235, %212 in 1 : vector<16x56xf32>, vector<16x8xf32> -> vector<16x64xf32>
    %237 = tpu.concatenate %226, %228, %230, %218, %187, %224, %232, %234, %236 in 0 : vector<16x64xf32>, vector<16x64xf32>, vector<16x64xf32>, vector<16x64xf32>, vector<16x64xf32>, vector<16x64xf32>, vector<16x64xf32>, vector<16x64xf32>, vector<16x64xf32> -> vector<144x64xf32>
    %238 = arith.truncf %237 : vector<144x64xf32> to vector<144x64xbf16>
    %cst_76 = arith.constant dense<0.000000e+00> : vector<16x64xf32>
    %239 = tpu.matmul %188, %238, %cst_76 {dimension_numbers = #tpu.dot_dimension_numbers<[1], [0], [0], [1], [0, 0, 1, 1], [], []>} : vector<16x144xbf16>, vector<144x64xbf16>, vector<16x64xf32> -> vector<16x64xf32>
    %240 = vector.broadcast %189 : vector<16x1xf32> to vector<16x64xf32>
    %241 = arith.addf %239, %240 : vector<16x64xf32>
    %c0_77 = arith.constant 0 : index
    %c0_78 = arith.constant 0 : index
    %242 = vector.load %arg15[%c0_77, %c0_78] : memref<64x256xf32, #tpu.memory_space<vmem>>, vector<64x256xf32>
    %cst_79 = arith.constant 0.000000e+00 : f32
    %243 = vector.broadcast %cst_79 : f32 to vector<16x64xf32>
    %244 = arith.maximumf %241, %243 : vector<16x64xf32>
    %cst_80 = arith.constant dense<0.000000e+00> : vector<16x256xf32>
    %245 = tpu.matmul %244, %242, %cst_80 {dimension_numbers = #tpu.dot_dimension_numbers<[1], [0], [0], [1], [0, 0, 1, 1], [], []>} : vector<16x64xf32>, vector<64x256xf32>, vector<16x256xf32> -> vector<16x256xf32>
    %c0_81 = arith.constant 0 : index
    %c0_82 = arith.constant 0 : index
    %246 = vector.load %arg10[%c0_81, %c0_82] : memref<1x144xbf16, #tpu.memory_space<vmem>>, vector<1x144xbf16>
    %c0_83 = arith.constant 0 : index
    %c0_84 = arith.constant 0 : index
    %247 = vector.load %arg11[%c0_83, %c0_84] : memref<1x1xf32, #tpu.memory_space<vmem>>, vector<1x1xf32>
    %248 = tpu.iota {dimensions = array<i32: 1>} : vector<1x256xi32>
    %c16_i32_85 = arith.constant 16 : i32
    %c0_i32_86 = arith.constant 0 : i32
    %249 = arith.cmpi eq, %c16_i32_85, %c0_i32_86 : i32
    %c1_i32_87 = arith.constant 1 : i32
    %250 = arith.select %249, %c1_i32_87, %c16_i32_85 : i32
    %251 = vector.broadcast %250 : i32 to vector<1x256xi32>
    %252 = arith.remsi %248, %251 : vector<1x256xi32>
    %c0_i32_88 = arith.constant 0 : i32
    %253 = vector.broadcast %c0_i32_88 : i32 to vector<1x256xi32>
    %254 = arith.cmpi ne, %252, %253 : vector<1x256xi32>
    %c0_i32_89 = arith.constant 0 : i32
    %255 = vector.broadcast %c0_i32_89 : i32 to vector<1x256xi32>
    %256 = arith.cmpi slt, %252, %255 : vector<1x256xi32>
    %c0_i32_90 = arith.constant 0 : i32
    %257 = arith.cmpi slt, %250, %c0_i32_90 : i32
    %258 = vector.broadcast %257 : i1 to vector<1x256xi1>
    %259 = vector.broadcast %258 : vector<1x256xi1> to vector<1x256xi1>
    %260 = arith.xori %256, %259 : vector<1x256xi1>
    %261 = arith.andi %260, %254 : vector<1x256xi1>
    %262 = vector.broadcast %250 : i32 to vector<1x256xi32>
    %263 = arith.addi %252, %262 : vector<1x256xi32>
    %264 = arith.select %261, %263, %252 : vector<1x256xi1>, vector<1x256xi32>
    %c0_i32_91 = arith.constant 0 : i32
    %265 = vector.broadcast %c0_i32_91 : i32 to vector<1x256xi32>
    %266 = arith.cmpi sgt, %264, %265 : vector<1x256xi32>
    %c15_i32_92 = arith.constant 15 : i32
    %267 = vector.broadcast %c15_i32_92 : i32 to vector<1x256xi32>
    %268 = arith.cmpi slt, %264, %267 : vector<1x256xi32>
    %cst_93 = arith.constant 0.000000e+00 : f32
    %269 = vector.broadcast %cst_93 : f32 to vector<16x1xf32>
    %cst_94 = arith.constant 0.000000e+00 : f32
    %270 = vector.broadcast %cst_94 : f32 to vector<16x16xf32>
    %271 = vector.extract_strided_slice %245 {offsets = [0, 0], sizes = [16, 255], strides = [1, 1]} : vector<16x256xf32> to vector<16x255xf32>
    %272 = tpu.concatenate %269, %271 in 1 : vector<16x1xf32>, vector<16x255xf32> -> vector<16x256xf32>
    %cst_95 = arith.constant 0.000000e+00 : f32
    %273 = vector.shape_cast %266 : vector<1x256xi1> to vector<1x256xi1>
    %274 = vector.broadcast %273 : vector<1x256xi1> to vector<16x256xi1>
    %275 = vector.broadcast %cst_95 : f32 to vector<16x256xf32>
    %276 = arith.select %274, %272, %275 : vector<16x256xi1>, vector<16x256xf32>
    %277 = vector.extract_strided_slice %245 {offsets = [0, 1], sizes = [16, 255], strides = [1, 1]} : vector<16x256xf32> to vector<16x255xf32>
    %278 = tpu.concatenate %277, %269 in 1 : vector<16x255xf32>, vector<16x1xf32> -> vector<16x256xf32>
    %cst_96 = arith.constant 0.000000e+00 : f32
    %279 = vector.shape_cast %268 : vector<1x256xi1> to vector<1x256xi1>
    %280 = vector.broadcast %279 : vector<1x256xi1> to vector<16x256xi1>
    %281 = vector.broadcast %cst_96 : f32 to vector<16x256xf32>
    %282 = arith.select %280, %278, %281 : vector<16x256xi1>, vector<16x256xf32>
    %283 = vector.extract_strided_slice %276 {offsets = [0, 0], sizes = [16, 240], strides = [1, 1]} : vector<16x256xf32> to vector<16x240xf32>
    %284 = tpu.concatenate %270, %283 in 1 : vector<16x16xf32>, vector<16x240xf32> -> vector<16x256xf32>
    %285 = vector.extract_strided_slice %245 {offsets = [0, 0], sizes = [16, 240], strides = [1, 1]} : vector<16x256xf32> to vector<16x240xf32>
    %286 = tpu.concatenate %270, %285 in 1 : vector<16x16xf32>, vector<16x240xf32> -> vector<16x256xf32>
    %287 = vector.extract_strided_slice %282 {offsets = [0, 0], sizes = [16, 240], strides = [1, 1]} : vector<16x256xf32> to vector<16x240xf32>
    %288 = tpu.concatenate %270, %287 in 1 : vector<16x16xf32>, vector<16x240xf32> -> vector<16x256xf32>
    %289 = vector.extract_strided_slice %276 {offsets = [0, 16], sizes = [16, 240], strides = [1, 1]} : vector<16x256xf32> to vector<16x240xf32>
    %290 = tpu.concatenate %289, %270 in 1 : vector<16x240xf32>, vector<16x16xf32> -> vector<16x256xf32>
    %291 = vector.extract_strided_slice %245 {offsets = [0, 16], sizes = [16, 240], strides = [1, 1]} : vector<16x256xf32> to vector<16x240xf32>
    %292 = tpu.concatenate %291, %270 in 1 : vector<16x240xf32>, vector<16x16xf32> -> vector<16x256xf32>
    %293 = vector.extract_strided_slice %282 {offsets = [0, 16], sizes = [16, 240], strides = [1, 1]} : vector<16x256xf32> to vector<16x240xf32>
    %294 = tpu.concatenate %293, %270 in 1 : vector<16x240xf32>, vector<16x16xf32> -> vector<16x256xf32>
    %295 = tpu.concatenate %284, %286, %288, %276, %245, %282, %290, %292, %294 in 0 : vector<16x256xf32>, vector<16x256xf32>, vector<16x256xf32>, vector<16x256xf32>, vector<16x256xf32>, vector<16x256xf32>, vector<16x256xf32>, vector<16x256xf32>, vector<16x256xf32> -> vector<144x256xf32>
    %296 = arith.truncf %295 : vector<144x256xf32> to vector<144x256xbf16>
    %cst_97 = arith.constant dense<0.000000e+00> : vector<1x256xf32>
    %297 = tpu.matmul %246, %296, %cst_97 {dimension_numbers = #tpu.dot_dimension_numbers<[1], [0], [0], [1], [0, 0, 1, 1], [], []>} : vector<1x144xbf16>, vector<144x256xbf16>, vector<1x256xf32> -> vector<1x256xf32>
    %298 = vector.broadcast %247 : vector<1x1xf32> to vector<1x256xf32>
    %299 = arith.addf %297, %298 : vector<1x256xf32>
    %300 = math.tanh %299 : vector<1x256xf32>
    %c0_98 = arith.constant 0 : index
    %c0_99 = arith.constant 0 : index
    %c0_100 = arith.constant 0 : index
    %301 = vector.load %arg16[%c0_98, %c0_99, %c0_100] : memref<1x1x256xf32, #tpu.memory_space<vmem>>, vector<1x1x256xf32>
    %302 = vector.shape_cast %301 : vector<1x1x256xf32> to vector<1x256xf32>
    %303 = vector.shape_cast %300 : vector<1x256xf32> to vector<1x1x256xf32>
    tpu.vector_store %arg16[%c0_98, %c0_99, %c0_100], %303 {strides = array<i32>} : memref<1x1x256xf32, #tpu.memory_space<vmem>>, vector<1x1x256xf32>,
    return
  }
  func.func @transform_0(%arg0: i32) -> (i32, i32, i32) {
    %c0_i32 = arith.constant 0 : i32
    %c0_i32_0 = arith.constant 0 : i32
    %c0_i32_1 = arith.constant 0 : i32
    return %arg0, %c0_i32, %c0_i32_0 : i32, i32, i32
  }
  func.func @transform_1(%arg0: i32) -> (i32, i32) {
    %c0_i32 = arith.constant 0 : i32
    %c0_i32_0 = arith.constant 0 : i32
    %c0_i32_1 = arith.constant 0 : i32
    return %c0_i32, %c0_i32_0 : i32, i32
  }
  func.func @transform_2(%arg0: i32) -> (i32, i32) {
    %c0_i32 = arith.constant 0 : i32
    %c0_i32_0 = arith.constant 0 : i32
    %c0_i32_1 = arith.constant 0 : i32
    return %c0_i32, %c0_i32_0 : i32, i32
  }
  func.func @transform_3(%arg0: i32) -> (i32, i32) {
    %c0_i32 = arith.constant 0 : i32
    %c0_i32_0 = arith.constant 0 : i32
    %c0_i32_1 = arith.constant 0 : i32
    return %c0_i32, %c0_i32_0 : i32, i32
  }
  func.func @transform_4(%arg0: i32) -> (i32, i32) {
    %c0_i32 = arith.constant 0 : i32
    %c0_i32_0 = arith.constant 0 : i32
    %c0_i32_1 = arith.constant 0 : i32
    return %c0_i32, %c0_i32_0 : i32, i32
  }
  func.func @transform_5(%arg0: i32) -> (i32, i32) {
    %c0_i32 = arith.constant 0 : i32
    %c0_i32_0 = arith.constant 0 : i32
    %c0_i32_1 = arith.constant 0 : i32
    return %c0_i32, %c0_i32_0 : i32, i32
  }
  func.func @transform_6(%arg0: i32) -> (i32, i32) {
    %c0_i32 = arith.constant 0 : i32
    %c0_i32_0 = arith.constant 0 : i32
    %c0_i32_1 = arith.constant 0 : i32
    return %c0_i32, %c0_i32_0 : i32, i32
  }
  func.func @transform_7(%arg0: i32) -> (i32, i32) {
    %c0_i32 = arith.constant 0 : i32
    %c0_i32_0 = arith.constant 0 : i32
    %c0_i32_1 = arith.constant 0 : i32
    return %c0_i32, %c0_i32_0 : i32, i32
  }
  func.func @transform_8(%arg0: i32) -> (i32, i32) {
    %c0_i32 = arith.constant 0 : i32
    %c0_i32_0 = arith.constant 0 : i32
    %c0_i32_1 = arith.constant 0 : i32
    return %c0_i32, %c0_i32_0 : i32, i32
  }
  func.func @transform_9(%arg0: i32) -> (i32, i32) {
    %c0_i32 = arith.constant 0 : i32
    %c0_i32_0 = arith.constant 0 : i32
    %c0_i32_1 = arith.constant 0 : i32
    return %c0_i32, %c0_i32_0 : i32, i32
  }
  func.func @transform_10(%arg0: i32) -> (i32, i32) {
    %c0_i32 = arith.constant 0 : i32
    %c0_i32_0 = arith.constant 0 : i32
    %c0_i32_1 = arith.constant 0 : i32
    return %c0_i32, %c0_i32_0 : i32, i32
  }
  func.func @transform_11(%arg0: i32) -> (i32, i32) {
    %c0_i32 = arith.constant 0 : i32
    %c0_i32_0 = arith.constant 0 : i32
    %c0_i32_1 = arith.constant 0 : i32
    return %c0_i32, %c0_i32_0 : i32, i32
  }
  func.func @transform_12(%arg0: i32) -> (i32, i32) {
    %c0_i32 = arith.constant 0 : i32
    %c0_i32_0 = arith.constant 0 : i32
    %c0_i32_1 = arith.constant 0 : i32
    return %c0_i32, %c0_i32_0 : i32, i32
  }
  func.func @transform_13(%arg0: i32) -> (i32, i32) {
    %c0_i32 = arith.constant 0 : i32
    %c0_i32_0 = arith.constant 0 : i32
    %c0_i32_1 = arith.constant 0 : i32
    return %c0_i32, %c0_i32_0 : i32, i32
  }
  func.func @transform_14(%arg0: i32) -> (i32, i32) {
    %c0_i32 = arith.constant 0 : i32
    %c0_i32_0 = arith.constant 0 : i32
    %c0_i32_1 = arith.constant 0 : i32
    return %c0_i32, %c0_i32_0 : i32, i32
  }
  func.func @transform_15(%arg0: i32) -> (i32, i32, i32) {
    %c0_i32 = arith.constant 0 : i32
    %c0_i32_0 = arith.constant 0 : i32
    %c0_i32_1 = arith.constant 0 : i32
    return %arg0, %c0_i32, %c0_i32_0 : i32, i32, i32
  }
}

</mosaic_0001>

<llo_original>
// kernel: net_forward.1
$region0: #{net_forward.1}
  #allocation0 [shape = 'u32[]', space=smem, size = 0x4, offset = 0x4, fixed_abs, tag = 'smem constant byte address 0x4 - core index']
  #allocation1 [shape = 'u32[144,128]{1,0:T(1,128)}', space=vmem, size = 0x12000, scoped, tag = 'internal scratch']
  #allocation2 [shape = 'f32[1,1]{1,0:T(1,128)S(1)}', space=vmem, size = 0x200, scoped, tag = 'scoped memory for net_forward.1']
  %s0 = inlined_call_operand.vmem [shape: f32[2,1,256], index: 0, kind: input, shape index: {}]
  %s1 = inlined_call_operand.vmem [shape: bf16[16,9], index: 1, kind: input, shape index: {}]
  %s2 = inlined_call_operand.vmem [shape: f32[16,1], index: 2, kind: input, shape index: {}]
  %s3 = inlined_call_operand.vmem [shape: bf16[32,144], index: 3, kind: input, shape index: {}]
  %s4 = inlined_call_operand.vmem [shape: f32[32,1], index: 4, kind: input, shape index: {}]
  %s5 = inlined_call_operand.vmem [shape: bf16[16,288], index: 5, kind: input, shape index: {}]
  %s6 = inlined_call_operand.vmem [shape: f32[16,1], index: 6, kind: input, shape index: {}]
  %s7 = inlined_call_operand.vmem [shape: bf16[16,144], index: 7, kind: input, shape index: {}]
  %s8 = inlined_call_operand.vmem [shape: f32[16,1], index: 8, kind: input, shape index: {}]
  %s9 = inlined_call_operand.vmem [shape: bf16[1,144], index: 9, kind: input, shape index: {}]
  %s10 = inlined_call_operand.<no memory space> [shape: f32[1,1], index: 10, kind: input, shape index: {}]
  %s11 = inlined_call_operand.vmem [shape: f32[256,64], index: 11, kind: input, shape index: {}]
  %s12 = inlined_call_operand.vmem [shape: f32[64,16], index: 12, kind: input, shape index: {}]
  %s13 = inlined_call_operand.vmem [shape: f32[16,64], index: 13, kind: input, shape index: {}]
  %s14 = inlined_call_operand.vmem [shape: f32[64,256], index: 14, kind: input, shape index: {}]
  %s15 = inlined_call_operand.vmem [shape: f32[2,1,256], index: 15, kind: output, shape index: {}]
  %s16 = sld [smem:[#allocation0]]
  $region93: #{net_forward.1} parent=0
    _
  %s18 = ssub.s32 1, %s16
  %s19 = scalar_select 0, %s18, %s16
  %v20 = vstv %s10
  %21 = vst [vmem:[#allocation2] sm:$0x1] %v20
  loop: start=0, step=1, limit=4
  $region2: #{net_forward.1} parent=0 // loop_pre_header
    _
  $region3: #{net_forward.1} parent=0 // loop_header
    %s23 = sphi 0, %s27
    %p24 = scmp.ge.s32.totalorder %s23, 4
    %s33 = sphi 0, %s35
    %s36 = sphi 0, %s33
    %s37 = sphi 0, %s36
    %s53 = sphi 0, %s37
    %s57 = sphi 0, %s57
    %s59 = sphi 0, %s57
    %s60 = sphi 0, %s59
    %s74 = sphi 0, %s60
    %s78 = sphi 0, %s78
    %s80 = sphi 0, %s78
    %s81 = sphi 0, %s80
    %s95 = sphi 0, %s81
    %s99 = sphi 0, %s99
    %s101 = sphi 0, %s99
    %s102 = sphi 0, %s101
    %s116 = sphi 0, %s102
    %s120 = sphi 0, %s120
    %s122 = sphi 0, %s120
    %s123 = sphi 0, %s122
    %s137 = sphi 0, %s123
    %s141 = sphi 0, %s141
    %s143 = sphi 0, %s141
    %s144 = sphi 0, %s143
    %s158 = sphi 0, %s144
    %s162 = sphi 0, %s162
    %s164 = sphi 0, %s162
    %s165 = sphi 0, %s164
    %s179 = sphi 0, %s165
    %s183 = sphi 0, %s183
    %s185 = sphi 0, %s183
    %s186 = sphi 0, %s185
    %s200 = sphi 0, %s186
    %s204 = sphi 0, %s204
    %s206 = sphi 0, %s204
    %s207 = sphi 0, %s206
    %s221 = sphi 0, %s207
    %s225 = sphi 0, %s225
    %s227 = sphi 0, %s225
    %s228 = sphi 0, %s227
    %s242 = sphi 0, %s228
    %s246 = sphi 0, %s246
    %s248 = sphi 0, %s246
    %s249 = sphi 0, %s248
    %s263 = sphi 0, %s249
    %s267 = sphi 0, %s267
    %s269 = sphi 0, %s267
    %s270 = sphi 0, %s269
    %s284 = sphi 0, %s270
    %s288 = sphi 0, %s288
    %s290 = sphi 0, %s288
    %s291 = sphi 0, %s290
    %s305 = sphi 0, %s291
    %s309 = sphi 0, %s309
    %s311 = sphi 0, %s309
    %s312 = sphi 0, %s311
    %s326 = sphi 0, %s312
    %s330 = sphi 0, %s330
    %s332 = sphi 0, %s330
    %s333 = sphi 0, %s332
    %s347 = sphi 0, %s333
    %s353 = sphi 0, %s355
    %s356 = sphi 0, %s353
    %s357 = sphi 0, %s356
    %s373 = sphi 0, %s357
  $region4: #{net_forward.1} parent=0 // loop_header_branch
    %26 = sbr.rel (%p24) target = $region8
  $region5: #{net_forward.1} parent=0 // loop_body
    %s28 = ssub.s32 %s23, 1
    %s29 = ssub.s32 %s23, 2
    %s30 = sadd.s32 %s23, 1
    %s31 = ssub.s32 %s23, %s30
    %p32 = scmp.eq.s32.totalorder %s31, 0
    %s34 = sadd.s32 %s33, 1
    %s35 = scalar_select %p32, %s33, %s34
    %p38 = pneg %p32
    %p39 = scmp.eq.s32.totalorder %s23, 1
    %p40 = por %p38, %p39
    %p41 = scmp.ne.s32.totalorder %s33, %s36
    %p42 = scmp.eq.s32.totalorder %s23, 0
    %p43 = por %p41, %p42
    %p44 = scmp.ne.s32.totalorder %s33, %s36
    %p45 = scmp.eq.s32.totalorder %s28, 1
    %p46 = por %p44, %p45
    %p47 = scmp.ne.s32.totalorder %s36, %s37
    %p48 = scmp.eq.s32.totalorder %s28, 0
    %p49 = por %p47, %p48
    %p50 = scmp.ne.s32.totalorder %s36, %s37
    %p51 = scmp.eq.s32.totalorder %s29, 1
    %p52 = por %p50, %p51
    %p54 = scmp.ne.s32.totalorder %s37, %s53
    %p55 = scmp.eq.s32.totalorder %s29, 0
    %p56 = por %p54, %p55
    %s58 = sadd.s32 %s57, 1
    %p61 = scmp.eq.s32.totalorder %s23, 1
    %p62 = scmp.ne.s32.totalorder %s57, %s59
    %p63 = scmp.eq.s32.totalorder %s23, 0
    %p64 = por %p62, %p63
    %p65 = scmp.ne.s32.totalorder %s57, %s59
    %p66 = scmp.eq.s32.totalorder %s28, 1
    %p67 = por %p65, %p66
    %p68 = scmp.ne.s32.totalorder %s59, %s60
    %p69 = scmp.eq.s32.totalorder %s28, 0
    %p70 = por %p68, %p69
    %p71 = scmp.ne.s32.totalorder %s59, %s60
    %p72 = scmp.eq.s32.totalorder %s29, 1
    %p73 = por %p71, %p72
    %p75 = scmp.ne.s32.totalorder %s60, %s74
    %p76 = scmp.eq.s32.totalorder %s29, 0
    %p77 = por %p75, %p76
    %s79 = sadd.s32 %s78, 1
    %p82 = scmp.eq.s32.totalorder %s23, 1
    %p83 = scmp.ne.s32.totalorder %s78, %s80
    %p84 = scmp.eq.s32.totalorder %s23, 0
    %p85 = por %p83, %p84
    %p86 = scmp.ne.s32.totalorder %s78, %s80
    %p87 = scmp.eq.s32.totalorder %s28, 1
    %p88 = por %p86, %p87
    %p89 = scmp.ne.s32.totalorder %s80, %s81
    %p90 = scmp.eq.s32.totalorder %s28, 0
    %p91 = por %p89, %p90
    %p92 = scmp.ne.s32.totalorder %s80, %s81
    %p93 = scmp.eq.s32.totalorder %s29, 1
    %p94 = por %p92, %p93
    %p96 = scmp.ne.s32.totalorder %s81, %s95
    %p97 = scmp.eq.s32.totalorder %s29, 0
    %p98 = por %p96, %p97
    %s100 = sadd.s32 %s99, 1
    %p103 = scmp.eq.s32.totalorder %s23, 1
    %p104 = scmp.ne.s32.totalorder %s99, %s101
    %p105 = scmp.eq.s32.totalorder %s23, 0
    %p106 = por %p104, %p105
    %p107 = scmp.ne.s32.totalorder %s99, %s101
    %p108 = scmp.eq.s32.totalorder %s28, 1
    %p109 = por %p107, %p108
    %p110 = scmp.ne.s32.totalorder %s101, %s102
    %p111 = scmp.eq.s32.totalorder %s28, 0
    %p112 = por %p110, %p111
    %p113 = scmp.ne.s32.totalorder %s101, %s102
    %p114 = scmp.eq.s32.totalorder %s29, 1
    %p115 = por %p113, %p114
    %p117 = scmp.ne.s32.totalorder %s102, %s116
    %p118 = scmp.eq.s32.totalorder %s29, 0
    %p119 = por %p117, %p118
    %s121 = sadd.s32 %s120, 1
    %p124 = scmp.eq.s32.totalorder %s23, 1
    %p125 = scmp.ne.s32.totalorder %s120, %s122
    %p126 = scmp.eq.s32.totalorder %s23, 0
    %p127 = por %p125, %p126
    %p128 = scmp.ne.s32.totalorder %s120, %s122
    %p129 = scmp.eq.s32.totalorder %s28, 1
    %p130 = por %p128, %p129
    %p131 = scmp.ne.s32.totalorder %s122, %s123
    %p132 = scmp.eq.s32.totalorder %s28, 0
    %p133 = por %p131, %p132
    %p134 = scmp.ne.s32.totalorder %s122, %s123
    %p135 = scmp.eq.s32.totalorder %s29, 1
    %p136 = por %p134, %p135
    %p138 = scmp.ne.s32.totalorder %s123, %s137
    %p139 = scmp.eq.s32.totalorder %s29, 0
    %p140 = por %p138, %p139
    %s142 = sadd.s32 %s141, 1
    %p145 = scmp.eq.s32.totalorder %s23, 1
    %p146 = scmp.ne.s32.totalorder %s141, %s143
    %p147 = scmp.eq.s32.totalorder %s23, 0
    %p148 = por %p146, %p147
    %p149 = scmp.ne.s32.totalorder %s141, %s143
    %p150 = scmp.eq.s32.totalorder %s28, 1
    %p151 = por %p149, %p150
    %p152 = scmp.ne.s32.totalorder %s143, %s144
    %p153 = scmp.eq.s32.totalorder %s28, 0
    %p154 = por %p152, %p153
    %p155 = scmp.ne.s32.totalorder %s143, %s144
    %p156 = scmp.eq.s32.totalorder %s29, 1
    %p157 = por %p155, %p156
    %p159 = scmp.ne.s32.totalorder %s144, %s158
    %p160 = scmp.eq.s32.totalorder %s29, 0
    %p161 = por %p159, %p160
    %s163 = sadd.s32 %s162, 1
    %p166 = scmp.eq.s32.totalorder %s23, 1
    %p167 = scmp.ne.s32.totalorder %s162, %s164
    %p168 = scmp.eq.s32.totalorder %s23, 0
    %p169 = por %p167, %p168
    %p170 = scmp.ne.s32.totalorder %s162, %s164
    %p171 = scmp.eq.s32.totalorder %s28, 1
    %p172 = por %p170, %p171
    %p173 = scmp.ne.s32.totalorder %s164, %s165
    %p174 = scmp.eq.s32.totalorder %s28, 0
    %p175 = por %p173, %p174
    %p176 = scmp.ne.s32.totalorder %s164, %s165
    %p177 = scmp.eq.s32.totalorder %s29, 1
    %p178 = por %p176, %p177
    %p180 = scmp.ne.s32.totalorder %s165, %s179
    %p181 = scmp.eq.s32.totalorder %s29, 0
    %p182 = por %p180, %p181
    %s184 = sadd.s32 %s183, 1
    %p187 = scmp.eq.s32.totalorder %s23, 1
    %p188 = scmp.ne.s32.totalorder %s183, %s185
    %p189 = scmp.eq.s32.totalorder %s23, 0
    %p190 = por %p188, %p189
    %p191 = scmp.ne.s32.totalorder %s183, %s185
    %p192 = scmp.eq.s32.totalorder %s28, 1
    %p193 = por %p191, %p192
    %p194 = scmp.ne.s32.totalorder %s185, %s186
    %p195 = scmp.eq.s32.totalorder %s28, 0
    %p196 = por %p194, %p195
    %p197 = scmp.ne.s32.totalorder %s185, %s186
    %p198 = scmp.eq.s32.totalorder %s29, 1
    %p199 = por %p197, %p198
    %p201 = scmp.ne.s32.totalorder %s186, %s200
    %p202 = scmp.eq.s32.totalorder %s29, 0
    %p203 = por %p201, %p202
    %s205 = sadd.s32 %s204, 1
    %p208 = scmp.eq.s32.totalorder %s23, 1
    %p209 = scmp.ne.s32.totalorder %s204, %s206
    %p210 = scmp.eq.s32.totalorder %s23, 0
    %p211 = por %p209, %p210
    %p212 = scmp.ne.s32.totalorder %s204, %s206
    %p213 = scmp.eq.s32.totalorder %s28, 1
    %p214 = por %p212, %p213
    %p215 = scmp.ne.s32.totalorder %s206, %s207
    %p216 = scmp.eq.s32.totalorder %s28, 0
    %p217 = por %p215, %p216
    %p218 = scmp.ne.s32.totalorder %s206, %s207
    %p219 = scmp.eq.s32.totalorder %s29, 1
    %p220 = por %p218, %p219
    %p222 = scmp.ne.s32.totalorder %s207, %s221
    %p223 = scmp.eq.s32.totalorder %s29, 0
    %p224 = por %p222, %p223
    %s226 = sadd.s32 %s225, 1
    %p229 = scmp.eq.s32.totalorder %s23, 1
    %p230 = scmp.ne.s32.totalorder %s225, %s227
    %p231 = scmp.eq.s32.totalorder %s23, 0
    %p232 = por %p230, %p231
    %p233 = scmp.ne.s32.totalorder %s225, %s227
    %p234 = scmp.eq.s32.totalorder %s28, 1
    %p235 = por %p233, %p234
    %p236 = scmp.ne.s32.totalorder %s227, %s228
    %p237 = scmp.eq.s32.totalorder %s28, 0
    %p238 = por %p236, %p237
    %p239 = scmp.ne.s32.totalorder %s227, %s228
    %p240 = scmp.eq.s32.totalorder %s29, 1
    %p241 = por %p239, %p240
    %p243 = scmp.ne.s32.totalorder %s228, %s242
    %p244 = scmp.eq.s32.totalorder %s29, 0
    %p245 = por %p243, %p244
    %s247 = sadd.s32 %s246, 1
    %p250 = scmp.eq.s32.totalorder %s23, 1
    %p251 = scmp.ne.s32.totalorder %s246, %s248
    %p252 = scmp.eq.s32.totalorder %s23, 0
    %p253 = por %p251, %p252
    %p254 = scmp.ne.s32.totalorder %s246, %s248
    %p255 = scmp.eq.s32.totalorder %s28, 1
    %p256 = por %p254, %p255
    %p257 = scmp.ne.s32.totalorder %s248, %s249
    %p258 = scmp.eq.s32.totalorder %s28, 0
    %p259 = por %p257, %p258
    %p260 = scmp.ne.s32.totalorder %s248, %s249
    %p261 = scmp.eq.s32.totalorder %s29, 1
    %p262 = por %p260, %p261
    %p264 = scmp.ne.s32.totalorder %s249, %s263
    %p265 = scmp.eq.s32.totalorder %s29, 0
    %p266 = por %p264, %p265
    %s268 = sadd.s32 %s267, 1
    %p271 = scmp.eq.s32.totalorder %s23, 1
    %p272 = scmp.ne.s32.totalorder %s267, %s269
    %p273 = scmp.eq.s32.totalorder %s23, 0
    %p274 = por %p272, %p273
    %p275 = scmp.ne.s32.totalorder %s267, %s269
    %p276 = scmp.eq.s32.totalorder %s28, 1
    %p277 = por %p275, %p276
    %p278 = scmp.ne.s32.totalorder %s269, %s270
    %p279 = scmp.eq.s32.totalorder %s28, 0
    %p280 = por %p278, %p279
    %p281 = scmp.ne.s32.totalorder %s269, %s270
    %p282 = scmp.eq.s32.totalorder %s29, 1
    %p283 = por %p281, %p282
    %p285 = scmp.ne.s32.totalorder %s270, %s284
    %p286 = scmp.eq.s32.totalorder %s29, 0
    %p287 = por %p285, %p286
    %s289 = sadd.s32 %s288, 1
    %p292 = scmp.eq.s32.totalorder %s23, 1
    %p293 = scmp.ne.s32.totalorder %s288, %s290
    %p294 = scmp.eq.s32.totalorder %s23, 0
    %p295 = por %p293, %p294
    %p296 = scmp.ne.s32.totalorder %s288, %s290
    %p297 = scmp.eq.s32.totalorder %s28, 1
    %p298 = por %p296, %p297
    %p299 = scmp.ne.s32.totalorder %s290, %s291
    %p300 = scmp.eq.s32.totalorder %s28, 0
    %p301 = por %p299, %p300
    %p302 = scmp.ne.s32.totalorder %s290, %s291
    %p303 = scmp.eq.s32.totalorder %s29, 1
    %p304 = por %p302, %p303
    %p306 = scmp.ne.s32.totalorder %s291, %s305
    %p307 = scmp.eq.s32.totalorder %s29, 0
    %p308 = por %p306, %p307
    %s310 = sadd.s32 %s309, 1
    %p313 = scmp.eq.s32.totalorder %s23, 1
    %p314 = scmp.ne.s32.totalorder %s309, %s311
    %p315 = scmp.eq.s32.totalorder %s23, 0
    %p316 = por %p314, %p315
    %p317 = scmp.ne.s32.totalorder %s309, %s311
    %p318 = scmp.eq.s32.totalorder %s28, 1
    %p319 = por %p317, %p318
    %p320 = scmp.ne.s32.totalorder %s311, %s312
    %p321 = scmp.eq.s32.totalorder %s28, 0
    %p322 = por %p320, %p321
    %p323 = scmp.ne.s32.totalorder %s311, %s312
    %p324 = scmp.eq.s32.totalorder %s29, 1
    %p325 = por %p323, %p324
    %p327 = scmp.ne.s32.totalorder %s312, %s326
    %p328 = scmp.eq.s32.totalorder %s29, 0
    %p329 = por %p327, %p328
    %s331 = sadd.s32 %s330, 1
    %p334 = scmp.eq.s32.totalorder %s23, 1
    %p335 = scmp.ne.s32.totalorder %s330, %s332
    %p336 = scmp.eq.s32.totalorder %s23, 0
    %p337 = por %p335, %p336
    %p338 = scmp.ne.s32.totalorder %s330, %s332
    %p339 = scmp.eq.s32.totalorder %s28, 1
    %p340 = por %p338, %p339
    %p341 = scmp.ne.s32.totalorder %s332, %s333
    %p342 = scmp.eq.s32.totalorder %s28, 0
    %p343 = por %p341, %p342
    %p344 = scmp.ne.s32.totalorder %s332, %s333
    %p345 = scmp.eq.s32.totalorder %s29, 1
    %p346 = por %p344, %p345
    %p348 = scmp.ne.s32.totalorder %s333, %s347
    %p349 = scmp.eq.s32.totalorder %s29, 0
    %p350 = por %p348, %p349
    %s351 = ssub.s32 %s23, %s30
    %p352 = scmp.eq.s32.totalorder %s351, 0
    %s354 = sadd.s32 %s353, 1
    %s355 = scalar_select %p352, %s353, %s354
    %p358 = pneg %p352
    %p359 = scmp.eq.s32.totalorder %s23, 1
    %p360 = por %p358, %p359
    %p361 = scmp.ne.s32.totalorder %s353, %s356
    %p362 = scmp.eq.s32.totalorder %s23, 0
    %p363 = por %p361, %p362
    %p364 = scmp.ne.s32.totalorder %s353, %s356
    %p365 = scmp.eq.s32.totalorder %s28, 1
    %p366 = por %p364, %p365
    %p367 = scmp.ne.s32.totalorder %s356, %s357
    %p368 = scmp.eq.s32.totalorder %s28, 0
    %p369 = por %p367, %p368
    %p370 = scmp.ne.s32.totalorder %s356, %s357
    %p371 = scmp.eq.s32.totalorder %s29, 1
    %p372 = por %p370, %p371
    %p374 = scmp.ne.s32.totalorder %s357, %s373
    %p375 = scmp.eq.s32.totalorder %s29, 0
    %p376 = por %p374, %p375
    %p377 = scmp.le.s32.totalorder 1, %s23
    %p378 = scmp.lt.s32.totalorder %s23, 3
    %p379 = pnand %p377, %p378
    %p380 = pneg %p379
    // Predicated region
    $region9: #{net_forward.1} parent=5 // pred_check
      _
    $region10: #{net_forward.1} parent=5 // pred_check_branch
      %382 = sbr.rel (%p379) target = $region12
    $region11: #{net_forward.1} parent=5 // pred_region
      %s383 = ssub.s32 %s23, 1
      // Predicated region
      $region13: #{net_forward.1} parent=11 // pred_check
        %p384 = pneg %p70
      $region14: #{net_forward.1} parent=11 // pred_check_branch
        %386 = sbr.rel (%p384) target = $region16
      $region15: #{net_forward.1} parent=11 // pred_region
        _
      $region16: #{net_forward.1} parent=11 // pred_fallthru
        _
      // Predicated region
      $region17: #{net_forward.1} parent=11 // pred_check
        %p387 = pneg %p91
      $region18: #{net_forward.1} parent=11 // pred_check_branch
        %389 = sbr.rel (%p387) target = $region20
      $region19: #{net_forward.1} parent=11 // pred_region
        _
      $region20: #{net_forward.1} parent=11 // pred_fallthru
        _
      // Predicated region
      $region21: #{net_forward.1} parent=11 // pred_check
        %p390 = pneg %p112
      $region22: #{net_forward.1} parent=11 // pred_check_branch
        %392 = sbr.rel (%p390) target = $region24
      $region23: #{net_forward.1} parent=11 // pred_region
        _
      $region24: #{net_forward.1} parent=11 // pred_fallthru
        _
      // Predicated region
      $region25: #{net_forward.1} parent=11 // pred_check
        %p393 = pneg %p133
      $region26: #{net_forward.1} parent=11 // pred_check_branch
        %395 = sbr.rel (%p393) target = $region28
      $region27: #{net_forward.1} parent=11 // pred_region
        _
      $region28: #{net_forward.1} parent=11 // pred_fallthru
        _
      // Predicated region
      $region29: #{net_forward.1} parent=11 // pred_check
        %p396 = pneg %p154
      $region30: #{net_forward.1} parent=11 // pred_check_branch
        %398 = sbr.rel (%p396) target = $region32
      $region31: #{net_forward.1} parent=11 // pred_region
        _
      $region32: #{net_forward.1} parent=11 // pred_fallthru
        _
      // Predicated region
      $region33: #{net_forward.1} parent=11 // pred_check
        %p399 = pneg %p175
      $region34: #{net_forward.1} parent=11 // pred_check_branch
        %401 = sbr.rel (%p399) target = $region36
      $region35: #{net_forward.1} parent=11 // pred_region
        _
      $region36: #{net_forward.1} parent=11 // pred_fallthru
        _
      // Predicated region
      $region37: #{net_forward.1} parent=11 // pred_check
        %p402 = pneg %p196
      $region38: #{net_forward.1} parent=11 // pred_check_branch
        %404 = sbr.rel (%p402) target = $region40
      $region39: #{net_forward.1} parent=11 // pred_region
        _
      $region40: #{net_forward.1} parent=11 // pred_fallthru
        _
      // Predicated region
      $region41: #{net_forward.1} parent=11 // pred_check
        %p405 = pneg %p217
      $region42: #{net_forward.1} parent=11 // pred_check_branch
        %407 = sbr.rel (%p405) target = $region44
      $region43: #{net_forward.1} parent=11 // pred_region
        _
      $region44: #{net_forward.1} parent=11 // pred_fallthru
        _
      // Predicated region
      $region45: #{net_forward.1} parent=11 // pred_check
        %p408 = pneg %p238
      $region46: #{net_forward.1} parent=11 // pred_check_branch
        %410 = sbr.rel (%p408) target = $region48
      $region47: #{net_forward.1} parent=11 // pred_region
        _
      $region48: #{net_forward.1} parent=11 // pred_fallthru
        _
      // Predicated region
      $region49: #{net_forward.1} parent=11 // pred_check
        %p411 = pneg %p259
      $region50: #{net_forward.1} parent=11 // pred_check_branch
        %413 = sbr.rel (%p411) target = $region52
      $region51: #{net_forward.1} parent=11 // pred_region
        _
      $region52: #{net_forward.1} parent=11 // pred_fallthru
        _
      // Predicated region
      $region53: #{net_forward.1} parent=11 // pred_check
        %p414 = pneg %p280
      $region54: #{net_forward.1} parent=11 // pred_check_branch
        %416 = sbr.rel (%p414) target = $region56
      $region55: #{net_forward.1} parent=11 // pred_region
        _
      $region56: #{net_forward.1} parent=11 // pred_fallthru
        _
      // Predicated region
      $region57: #{net_forward.1} parent=11 // pred_check
        %p417 = pneg %p301
      $region58: #{net_forward.1} parent=11 // pred_check_branch
        %419 = sbr.rel (%p417) target = $region60
      $region59: #{net_forward.1} parent=11 // pred_region
        _
      $region60: #{net_forward.1} parent=11 // pred_fallthru
        _
      // Predicated region
      $region61: #{net_forward.1} parent=11 // pred_check
        %p420 = pneg %p322
      $region62: #{net_forward.1} parent=11 // pred_check_branch
        %422 = sbr.rel (%p420) target = $region64
      $region63: #{net_forward.1} parent=11 // pred_region
        _
      $region64: #{net_forward.1} parent=11 // pred_fallthru
        _
      // Predicated region
      $region65: #{net_forward.1} parent=11 // pred_check
        %p423 = pneg %p343
      $region66: #{net_forward.1} parent=11 // pred_check_branch
        %425 = sbr.rel (%p423) target = $region68
      $region67: #{net_forward.1} parent=11 // pred_region
        _
      $region68: #{net_forward.1} parent=11 // pred_fallthru
        _
    $region12: #{net_forward.1} parent=5 // pred_fallthru
      _
    %p426 = scmp.lt.s32.totalorder %s23, 2
    // Predicated region
    $region69: #{net_forward.1} parent=5 // pred_check
      %p427 = pneg %p426
    $region70: #{net_forward.1} parent=5 // pred_check_branch
      %429 = sbr.rel (%p427) target = $region72
    $region71: #{net_forward.1} parent=5 // pred_region
      // Predicated region
      $region73: #{net_forward.1} parent=71 // pred_check
        %p430 = pneg %p43
      $region74: #{net_forward.1} parent=71 // pred_check_branch
        %432 = sbr.rel (%p430) target = $region76
      $region75: #{net_forward.1} parent=71 // pred_region
        %p433 = scmp.lt.s32.totalorder %s23, 1
        %s434 = scalar_select %p433, %s23, 1
        %s435 = smul.addr %s434, 2
        %s436 = scalar_lea.vmem %s0, %s435
      $region76: #{net_forward.1} parent=71 // pred_fallthru
        _
    $region72: #{net_forward.1} parent=5 // pred_fallthru
      _
    %p437 = scmp.le.s32.totalorder 1, %s23
    %p438 = scmp.lt.s32.totalorder %s23, 3
    %p439 = pnand %p437, %p438
    %p440 = pneg %p439
    // Predicated region
    $region77: #{net_forward.1} parent=5 // pred_check
      _
    $region78: #{net_forward.1} parent=5 // pred_check_branch
      %442 = sbr.rel (%p439) target = $region80
    $region79: #{net_forward.1} parent=5 // pred_region
      %s443 = ssub.s32 %s23, 1
      %p444 = scmp.lt.s32.totalorder %s28, 1
      %s445 = scalar_select %p444, %s28, 1
      %s446 = smul.addr %s445, 2
      %s447 = scalar_lea.vmem %s0, %s446
      %p448 = pneg %p49
      %p449 = pneg %p46
      %p450 = pneg %p70
      %p451 = pneg %p67
      %p452 = pneg %p91
      %p453 = pneg %p88
      %p454 = pneg %p112
      %p455 = pneg %p109
      %p456 = pneg %p133
      %p457 = pneg %p130
      %p458 = pneg %p154
      %p459 = pneg %p151
      %p460 = pneg %p175
      %p461 = pneg %p172
      %p462 = pneg %p196
      %p463 = pneg %p193
      %p464 = pneg %p217
      %p465 = pneg %p214
      %p466 = pneg %p238
      %p467 = pneg %p235
      %p468 = pneg %p259
      %p469 = pneg %p256
      %p470 = pneg %p280
      %p471 = pneg %p277
      %p472 = pneg %p301
      %p473 = pneg %p298
      %p474 = pneg %p322
      %p475 = pneg %p319
      %p476 = pneg %p343
      %p477 = pneg %p340
      %p478 = pneg %p369
      %p479 = pneg %p366
      %p480 = scmp.lt.s32.totalorder %s28, 1
      %s481 = scalar_select %p480, %s28, 1
      %s482 = smul.addr %s481, 2
      %s483 = scalar_lea.vmem %s15, %s482
      %p484 = scmp.lt.s32.totalorder %s28, 1
      %s485 = scalar_select %p484, %s28, 1
      %s486 = smul.addr %s485, 2
      %s487 = scalar_lea.vmem %s0, %s486
      %p488 = scmp.lt.s32.totalorder %s28, 1
      %s489 = scalar_select %p488, %s28, 1
      %s490 = smul.addr %s489, 2
      %s491 = scalar_lea.vmem %s15, %s490
      %v493 = vld [vmem:[%s487] sm:$0x3]
      %v494 = vld [vmem:[%s1] sm:$0xf]
      %v495 = vld [vmem:[%s1 + $0x4] sm:$0xf]
      %v496 = vld [vmem:[%s2] sm:$0xff]
      %v497 = vld [vmem:[%s2 + $0x8] sm:$0xff]
      %v498 = vlaneseq
      %v499 = vand.u32 %v498, 127
      %v500 = vadd.s32 %v499, 128
      %vm501 = vcmp.lt.s32.totalorder %v499, 0
      %v502 = vsub.s32 0, %v499
      %v503 = vsel %vm501, %v502, %v499
      %v504 = vshrl.u32 %v503, 4
      %v505 = vand.u32 %v503, 15
      %v506 = vsub.s32 0, %v505
      %v507 = vsel %vm501, %v506, %v505
      %vm508 = vcmp.lt.s32.totalorder %v500, 0
      %v509 = vsub.s32 0, %v500
      %v510 = vsel %vm508, %v509, %v500
      %v511 = vshrl.u32 %v510, 4
      %v512 = vand.u32 %v510, 15
      %v513 = vsub.s32 0, %v512
      %v514 = vsel %vm508, %v513, %v512
      %vm515 = vcmp.ne.s32.totalorder %v507, 0
      %vm516 = vcmp.ne.s32.totalorder %v514, 0
      %vm517 = vcmp.lt.s32.totalorder %v507, 0
      %vm518 = vcmp.lt.s32.totalorder %v514, 0
      %vm519 = vmand %vm517, %vm515
      %vm520 = vmand %vm518, %vm516
      %v521 = vadd.s32 %v507, 16
      %v522 = vadd.s32 %v514, 16
      %v523 = vsel %vm519, %v521, %v507
      %v524 = vsel %vm520, %v522, %v514
      %vm525 = vcmp.gt.s32.totalorder %v523, 0
      %vm526 = vcmp.gt.s32.totalorder %v524, 0
      %vm527 = vcmp.lt.s32.totalorder %v523, 15
      %vm528 = vcmp.lt.s32.totalorder %v524, 15
      %v530 = vlaneseq
      %v531 = vshrl.u32 %v530, 7
      %v532 = vsub.s32 0, %v531
      %v533 = vrot.slane %v493, %v532
      %v534 = vlaneseq
      %v535 = vshrl.u32 %v534, 7
      %v536 = vsub.s32 1, %v535
      %v537 = vrot.slane %v493, %v536
      %538 = vrot.lane.b32.xlu0 %v533, 1
      %v539 = vpop.permute.xlu0 %538
      %540 = vrot.lane.b32.xlu0 %v537, 1
      %v541 = vpop.permute.xlu0 %540
      %vm542 = vcmask 7168
      %v543 = vsel %vm542, %v539, %v541
      %v546 = vsel %vm542, 0.0, %v539
      %v547 = vsel %vm525, %v546, 0.0
      %v548 = vsel %vm526, %v543, 0.0
      %549 = vrot.lane.b32.xlu0 %v533, 127
      %v550 = vpop.permute.xlu0 %549
      %551 = vrot.lane.b32.xlu0 %v537, 127
      %v552 = vpop.permute.xlu0 %551
      %vm553 = vcmask 1039360
      %v554 = vsel %vm553, %v550, %v552
      %v557 = vsel %vm553, %v552, 0.0
      %v558 = vsel %vm527, %v554, 0.0
      %v559 = vsel %vm528, %v557, 0.0
      %562 = vrot.lane.b32.xlu0 %v547, 16
      %v563 = vpop.permute.xlu0 %562
      %564 = vrot.lane.b32.xlu0 %v548, 16
      %v565 = vpop.permute.xlu0 %564
      %vm566 = vcmask 130048
      %v567 = vsel %vm566, %v563, %v565
      %v570 = vsel %vm566, 0.0, %v563
      %571 = vrot.lane.b32.xlu0 %v533, 16
      %v572 = vpop.permute.xlu0 %571
      %573 = vrot.lane.b32.xlu0 %v537, 16
      %v574 = vpop.permute.xlu0 %573
      %v575 = vsel %vm566, %v572, %v574
      %v577 = vsel %vm566, 0.0, %v572
      %580 = vrot.lane.b32.xlu0 %v558, 16
      %v581 = vpop.permute.xlu0 %580
      %582 = vrot.lane.b32.xlu0 %v559, 16
      %v583 = vpop.permute.xlu0 %582
      %v584 = vsel %vm566, %v581, %v583
      %v586 = vsel %vm566, 0.0, %v581
      %587 = vrot.lane.b32.xlu0 %v547, 112
      %v588 = vpop.permute.xlu0 %587
      %589 = vrot.lane.b32.xlu0 %v548, 112
      %v590 = vpop.permute.xlu0 %589
      %vm591 = vcmask 916480
      %v592 = vsel %vm591, %v588, %v590
      %v594 = vsel %vm591, %v590, 0.0
      %595 = vrot.lane.b32.xlu0 %v533, 112
      %v596 = vpop.permute.xlu0 %595
      %597 = vrot.lane.b32.xlu0 %v537, 112
      %v598 = vpop.permute.xlu0 %597
      %v599 = vsel %vm591, %v596, %v598
      %v601 = vsel %vm591, %v598, 0.0
      %602 = vrot.lane.b32.xlu0 %v558, 112
      %v603 = vpop.permute.xlu0 %602
      %604 = vrot.lane.b32.xlu0 %v559, 112
      %v605 = vpop.permute.xlu0 %604
      %v606 = vsel %vm591, %v603, %v605
      %v609 = vsel %vm591, %v605, 0.0
      %v611 = vrot.slane %v577, 7
      %v612 = vrot.slane %v575, 7
      %v616 = vrot.slane %v586, 6
      %v617 = vrot.slane %v584, 6
      %v620 = vrot.slane %v547, 5
      %v621 = vrot.slane %v548, 5
      %v626 = vrot.slane %v558, 3
      %v627 = vrot.slane %v559, 3
      %v631 = vrot.slane %v592, 2
      %v632 = vrot.slane %v594, 2
      %v636 = vrot.slane %v599, 1
      %v637 = vrot.slane %v601, 1
      %vm640 = vcmask 1040384
      %v641 = vsel %vm640, %v570, %v611
      %v642 = vsel %vm640, %v567, %v612
      %vm643 = vcmask 1041408
      %v644 = vsel %vm643, %v641, %v616
      %v645 = vsel %vm643, %v642, %v617
      %vm646 = vcmask 1042432
      %v647 = vsel %vm646, %v644, %v620
      %v648 = vsel %vm646, %v645, %v621
      %vm649 = vcmask 1043456
      %v650 = vsel %vm649, %v647, %v533
      %v651 = vsel %vm649, %v648, %v537
      %vm652 = vcmask 1044480
      %v653 = vsel %vm652, %v650, %v626
      %v654 = vsel %vm652, %v651, %v627
      %vm655 = vcmask 1045504
      %v656 = vsel %vm655, %v653, %v631
      %v657 = vsel %vm655, %v654, %v632
      %vm658 = vcmask 1046528
      %v659 = vsel %vm658, %v656, %v636
      %v660 = vsel %vm658, %v657, %v637
      %v661 = vpack.c.bf16 %v606, %v659
      %v662 = vpack.c.bf16 %v609, %v660
      %664 = vset.pattern.permute.xlu0 0
      %665 = vperm.xlu0 %664, %v496
      %v666 = vpop.permute.xlu0 %665
      %669 = vset.pattern.permute.xlu0 0
      %670 = vperm.xlu0 %669, %v497
      %v671 = vpop.permute.xlu0 %670
      %v675 = vunpack.c.l.b16 %v494
      %v676 = vunpack.c.l.b16 %v495
      %v677 = vpack.c.b16 %v676, %v675
      %vm678 = vcmask 72704
      %v680 = vsel %vm678, %v677, 0
      %v682 = vsel %vm649, 4294967295, 65535
      %v683 = vsel %vm652, %v682, 0
      %v685 = vand.u32 %v661, %v683
      %v688 = vand.u32 %v662, %v683
      %690 = vmatprep.subr.bf16.mxu0 0
      %691 = vmatpush1.bf16.msra.mxu0 0
      %692 = vmatprep.subr.bf16.mxu0 0
      %693 = vmatpush1.bf16.msra.mxu0 0
      %694 = vmatprep.subr.bf16.mxu0 0
      %695 = vmatpush1.bf16.msra.mxu0 0
      %696 = vmatprep.subr.bf16.mxu0 0
      %697 = vmatpush1.bf16.msra.mxu0 0
      %698 = vmatprep.subr.bf16.mxu0 0
      %699 = vmatpush1.bf16.msra.mxu0 0
      %700 = vmatprep.subr.bf16.mxu0 0
      %701 = vmatpush1.bf16.msra.mxu0 0
      %702 = vmatprep.subr.bf16.mxu0 0
      %703 = vmatpush1.bf16.msra.mxu0 0
      %704 = vmatprep.subr.bf16.mxu0 %v688
      %705 = vmatpush1.bf16.msra.mxu0 %v685
      %706 = vmatprep.subr.bf16.mxu0 0
      %707 = vmatpush2.bf16.msra.mxu0 0
      %708 = vmatprep.subr.bf16.mxu0 0
      %709 = vmatpush2.bf16.msra.mxu0 0
      %710 = vmatprep.subr.bf16.mxu0 0
      %711 = vmatpush2.bf16.msra.mxu0 0
      %712 = vmatprep.subr.bf16.mxu0 0
      %713 = vmatpush2.bf16.msra.mxu0 0
      %714 = vmatprep.subr.bf16.mxu0 0
      %715 = vmatpush2.bf16.msra.mxu0 0
      %716 = vmatprep.subr.bf16.mxu0 0
      %717 = vmatpush2.bf16.msra.mxu0 0
      %718 = vmatprep.subr.bf16.mxu0 0
      %719 = vmatpush2.bf16.msra.mxu0 0
      %720 = vmatprep.subr.bf16.mxu0 0
      %721 = vmatpush2.bf16.msra.mxu0 0
      %722 = vmatprep.mubr.bf16.mxu0 0
      %723 = vmatmul.mubr.bf16.gmra.mxu0 %v680
      %v724 = vpop.f32.mrf.mxu0
      %v725 = vadd.f32 %v666, %v724
      %v726 = vpop.f32.mrf.mxu0
      %v727 = vadd.f32 %v666, %v726
      %v728 = vpop.f32.mrf.mxu0
      %v729 = vadd.f32 %v671, %v728
      %v730 = vpop.f32.mrf.mxu0
      %v731 = vadd.f32 %v671, %v730
      %732 = vdwg.mxu0
      %v733 = vld [vmem:[%s11] sm:$0xff]
      %v734 = vld [vmem:[%s11 + $0x8] sm:$0xff]
      %v735 = vld [vmem:[%s11 + $0x10] sm:$0xff]
      %v736 = vld [vmem:[%s11 + $0x18] sm:$0xff]
      %v737 = vld [vmem:[%s11 + $0x20] sm:$0xff]
      %v738 = vld [vmem:[%s11 + $0x28] sm:$0xff]
      %v739 = vld [vmem:[%s11 + $0x30] sm:$0xff]
      %v740 = vld [vmem:[%s11 + $0x38] sm:$0xff]
      %v741 = vld [vmem:[%s11 + $0x40] sm:$0xff]
      %v742 = vld [vmem:[%s11 + $0x48] sm:$0xff]
      %v743 = vld [vmem:[%s11 + $0x50] sm:$0xff]
      %v744 = vld [vmem:[%s11 + $0x58] sm:$0xff]
      %v745 = vld [vmem:[%s11 + $0x60] sm:$0xff]
      %v746 = vld [vmem:[%s11 + $0x68] sm:$0xff]
      %v747 = vld [vmem:[%s11 + $0x70] sm:$0xff]
      %v748 = vld [vmem:[%s11 + $0x78] sm:$0xff]
      %v749 = vld [vmem:[%s11 + $0x80] sm:$0xff]
      %v750 = vld [vmem:[%s11 + $0x88] sm:$0xff]
      %v751 = vld [vmem:[%s11 + $0x90] sm:$0xff]
      %v752 = vld [vmem:[%s11 + $0x98] sm:$0xff]
      %v753 = vld [vmem:[%s11 + $0xa0] sm:$0xff]
      %v754 = vld [vmem:[%s11 + $0xa8] sm:$0xff]
      %v755 = vld [vmem:[%s11 + $0xb0] sm:$0xff]
      %v756 = vld [vmem:[%s11 + $0xb8] sm:$0xff]
      %v757 = vld [vmem:[%s11 + $0xc0] sm:$0xff]
      %v758 = vld [vmem:[%s11 + $0xc8] sm:$0xff]
      %v759 = vld [vmem:[%s11 + $0xd0] sm:$0xff]
      %v760 = vld [vmem:[%s11 + $0xd8] sm:$0xff]
      %v761 = vld [vmem:[%s11 + $0xe0] sm:$0xff]
      %v762 = vld [vmem:[%s11 + $0xe8] sm:$0xff]
      %v763 = vld [vmem:[%s11 + $0xf0] sm:$0xff]
      %v764 = vld [vmem:[%s11 + $0xf8] sm:$0xff]
      %769 = vrot.lane.b32.xlu0 %v725, 127
      %v770 = vpop.permute.xlu0 %769
      %771 = vrot.lane.b32.xlu0 %v727, 127
      %v772 = vpop.permute.xlu0 %771
      %773 = vrot.lane.b32.xlu0 %v729, 127
      %v774 = vpop.permute.xlu0 %773
      %775 = vrot.lane.b32.xlu0 %v731, 127
      %v776 = vpop.permute.xlu0 %775
      %v777 = vsel %vm553, %v770, %v772
      %v778 = vsel %vm553, %v774, %v776
      %v783 = vsel %vm553, %v772, 0.0
      %v784 = vsel %vm553, %v776, 0.0
      %v785 = vmax.f32 %v725, %v777
      %v786 = vmax.f32 %v727, %v783
      %v787 = vmax.f32 %v729, %v778
      %v788 = vmax.f32 %v731, %v784
      %793 = vrot.lane.b32.xlu0 %v785, 112
      %v794 = vpop.permute.xlu0 %793
      %795 = vrot.lane.b32.xlu0 %v786, 112
      %v796 = vpop.permute.xlu0 %795
      %797 = vrot.lane.b32.xlu0 %v787, 112
      %v798 = vpop.permute.xlu0 %797
      %799 = vrot.lane.b32.xlu0 %v788, 112
      %v800 = vpop.permute.xlu0 %799
      %v801 = vsel %vm591, %v794, %v796
      %v802 = vsel %vm591, %v798, %v800
      %v807 = vsel %vm591, %v796, 0.0
      %v808 = vsel %vm591, %v800, 0.0
      %v809 = vmax.f32 %v785, %v801
      %v810 = vmax.f32 %v786, %v807
      %v811 = vmax.f32 %v787, %v802
      %v812 = vmax.f32 %v788, %v808
      %813 = vmatprep.subr.mxu0 0.0
      %814 = vmatpush1.msra.mxu0 %v748
      %815 = vmatprep.subr.mxu0 0.0
      %816 = vmatpush1.msra.mxu0 %v747
      %817 = vmatprep.subr.mxu0 0.0
      %818 = vmatpush1.msra.mxu0 %v746
      %819 = vmatprep.subr.mxu0 0.0
      %820 = vmatpush1.msra.mxu0 %v745
      %821 = vmatprep.subr.mxu0 0.0
      %822 = vmatpush1.msra.mxu0 %v744
      %823 = vmatprep.subr.mxu0 0.0
      %824 = vmatpush1.msra.mxu0 %v743
      %825 = vmatprep.subr.mxu0 0.0
      %826 = vmatpush1.msra.mxu0 %v742
      %827 = vmatprep.subr.mxu0 0.0
      %828 = vmatpush1.msra.mxu0 %v741
      %829 = vmatprep.subr.mxu0 0.0
      %830 = vmatpush1.msra.mxu0 %v740
      %831 = vmatprep.subr.mxu0 0.0
      %832 = vmatpush1.msra.mxu0 %v739
      %833 = vmatprep.subr.mxu0 0.0
      %834 = vmatpush1.msra.mxu0 %v738
      %835 = vmatprep.subr.mxu0 0.0
      %836 = vmatpush1.msra.mxu0 %v737
      %837 = vmatprep.subr.mxu0 0.0
      %838 = vmatpush1.msra.mxu0 %v736
      %839 = vmatprep.subr.mxu0 0.0
      %840 = vmatpush1.msra.mxu0 %v735
      %841 = vmatprep.subr.mxu0 0.0
      %842 = vmatpush1.msra.mxu0 %v734
      %843 = vmatprep.subr.mxu0 0.0
      %844 = vmatpush1.msra.mxu0 %v733
      %845 = vmatprep.subr.mxu0 0.0
      %846 = vmatpush2.msra.mxu0 %v764
      %847 = vmatprep.subr.mxu0 0.0
      %848 = vmatpush2.msra.mxu0 %v763
      %849 = vmatprep.subr.mxu0 0.0
      %850 = vmatpush2.msra.mxu0 %v762
      %851 = vmatprep.subr.mxu0 0.0
      %852 = vmatpush2.msra.mxu0 %v761
      %853 = vmatprep.subr.mxu0 0.0
      %854 = vmatpush2.msra.mxu0 %v760
      %855 = vmatprep.subr.mxu0 0.0
      %856 = vmatpush2.msra.mxu0 %v759
      %857 = vmatprep.subr.mxu0 0.0
      %858 = vmatpush2.msra.mxu0 %v758
      %859 = vmatprep.subr.mxu0 0.0
      %860 = vmatpush2.msra.mxu0 %v757
      %861 = vmatprep.subr.mxu0 0.0
      %862 = vmatpush2.msra.mxu0 %v756
      %863 = vmatprep.subr.mxu0 0.0
      %864 = vmatpush2.msra.mxu0 %v755
      %865 = vmatprep.subr.mxu0 0.0
      %866 = vmatpush2.msra.mxu0 %v754
      %867 = vmatprep.subr.mxu0 0.0
      %868 = vmatpush2.msra.mxu0 %v753
      %869 = vmatprep.subr.mxu0 0.0
      %870 = vmatpush2.msra.mxu0 %v752
      %871 = vmatprep.subr.mxu0 0.0
      %872 = vmatpush2.msra.mxu0 %v751
      %873 = vmatprep.subr.mxu0 0.0
      %874 = vmatpush2.msra.mxu0 %v750
      %875 = vmatprep.subr.mxu0 0.0
      %876 = vmatpush2.msra.mxu0 %v749
      %877 = vmatprep.mubr.f32.mxu0 %v810
      %878 = vmatmul.mubr.f32.gmra.mxu0 %v809
      %v879 = vpop.f32.mrf.mxu0
      %v880 = vadd.f32 0.0, %v879
      %v881 = vpop.f32.mrf.mxu0
      %882 = vmatprep.mubr.f32.mxu0 %v812
      %883 = vmatmul.mubr.f32.gmra.mxu0 %v811
      %v884 = vpop.f32.mrf.mxu0
      %v885 = vadd.f32 0.0, %v884
      %v886 = vpop.f32.mrf.mxu0
      %887 = vdwg.mxu0
      %v888 = vmax.f32 %v880, 0.0
      %v889 = vmax.f32 %v885, 0.0
      %v890 = vld [vmem:[%s3] sm:$0xff]
      %v891 = vld [vmem:[%s3 + $0x8] sm:$0xff]
      %v892 = vld [vmem:[%s3 + $0x10] sm:$0xff]
      %v893 = vld [vmem:[%s3 + $0x18] sm:$0xff]
      %v894 = vld [vmem:[%s4] sm:$0xff]
      %v895 = vld [vmem:[%s4 + $0x8] sm:$0xff]
      %v896 = vld [vmem:[%s4 + $0x10] sm:$0xff]
      %v897 = vld [vmem:[%s4 + $0x18] sm:$0xff]
      %vm898 = vcmp.lt.s32.totalorder %v499, 0
      %v899 = vsub.s32 0, %v499
      %v900 = vsel %vm898, %v899, %v499
      %v901 = vshrl.u32 %v900, 3
      %v902 = vand.u32 %v900, 7
      %v903 = vsub.s32 0, %v902
      %v904 = vsel %vm898, %v903, %v902
      %vm905 = vcmp.ne.s32.totalorder %v904, 0
      %vm906 = vcmp.lt.s32.totalorder %v904, 0
      %vm907 = vmand %vm906, %vm905
      %v908 = vadd.s32 %v904, 8
      %v909 = vsel %vm907, %v908, %v904
      %vm910 = vcmp.gt.s32.totalorder %v909, 0
      %vm911 = vcmp.lt.s32.totalorder %v909, 7
      %914 = vrot.lane.b32.xlu0 %v888, 1
      %v915 = vpop.permute.xlu0 %914
      %916 = vrot.lane.b32.xlu0 %v889, 1
      %v917 = vpop.permute.xlu0 %916
      %v920 = vsel %vm542, 0.0, %v915
      %v921 = vsel %vm542, 0.0, %v917
      %v922 = vsel %vm910, 1, 0
      %vm923 = vcmp.eq.s32.totalorder %v922, 1
      %v924 = vsel %vm923, %v920, 0.0
      %v925 = vsel %vm923, %v921, 0.0
      %926 = vrot.lane.b32.xlu0 %v888, 127
      %v927 = vpop.permute.xlu0 %926
      %928 = vrot.lane.b32.xlu0 %v889, 127
      %v929 = vpop.permute.xlu0 %928
      %vm932 = vcmask 515072
      %v933 = vsel %vm932, %v927, 0.0
      %v934 = vsel %vm932, %v929, 0.0
      %v935 = vsel %vm911, 1, 0
      %vm936 = vcmp.eq.s32.totalorder %v935, 1
      %v937 = vsel %vm936, %v933, 0.0
      %v938 = vsel %vm936, %v934, 0.0
      %941 = vrot.lane.b32.xlu0 %v924, 8
      %v942 = vpop.permute.xlu0 %941
      %943 = vrot.lane.b32.xlu0 %v925, 8
      %v944 = vpop.permute.xlu0 %943
      %vm947 = vcmask 64512
      %v948 = vsel %vm947, 0.0, %v942
      %v949 = vsel %vm947, 0.0, %v944
      %950 = vrot.lane.b32.xlu0 %v888, 8
      %v951 = vpop.permute.xlu0 %950
      %952 = vrot.lane.b32.xlu0 %v889, 8
      %v953 = vpop.permute.xlu0 %952
      %v956 = vsel %vm947, 0.0, %v951
      %v957 = vsel %vm947, 0.0, %v953
      %960 = vrot.lane.b32.xlu0 %v937, 8
      %v961 = vpop.permute.xlu0 %960
      %962 = vrot.lane.b32.xlu0 %v938, 8
      %v963 = vpop.permute.xlu0 %962
      %v966 = vsel %vm947, 0.0, %v961
      %v967 = vsel %vm947, 0.0, %v963
      %968 = vrot.lane.b32.xlu0 %v924, 120
      %v969 = vpop.permute.xlu0 %968
      %970 = vrot.lane.b32.xlu0 %v925, 120
      %v971 = vpop.permute.xlu0 %970
      %vm974 = vcmask 457728
      %v975 = vsel %vm974, %v969, 0.0
      %v976 = vsel %vm974, %v971, 0.0
      %977 = vrot.lane.b32.xlu0 %v888, 120
      %v978 = vpop.permute.xlu0 %977
      %979 = vrot.lane.b32.xlu0 %v889, 120
      %v980 = vpop.permute.xlu0 %979
      %v983 = vsel %vm974, %v978, 0.0
      %v984 = vsel %vm974, %v980, 0.0
      %985 = vrot.lane.b32.xlu0 %v937, 120
      %v986 = vpop.permute.xlu0 %985
      %987 = vrot.lane.b32.xlu0 %v938, 120
      %v988 = vpop.permute.xlu0 %987
      %v991 = vsel %vm974, %v986, 0.0
      %v992 = vsel %vm974, %v988, 0.0
      %v993 = vpack.c.bf16 %v949, %v948
      %v994 = vpack.c.bf16 %v957, %v956
      %v995 = vpack.c.bf16 %v967, %v966
      %v996 = vpack.c.bf16 %v925, %v924
      %v997 = vpack.c.bf16 %v889, %v888
      %v998 = vpack.c.bf16 %v938, %v937
      %v999 = vpack.c.bf16 %v976, %v975
      %v1000 = vpack.c.bf16 %v984, %v983
      %v1001 = vpack.c.bf16 %v992, %v991
      %1003 = vset.pattern.permute.xlu0 0
      %1004 = vperm.xlu0 %1003, %v894
      %v1005 = vpop.permute.xlu0 %1004
      %1008 = vset.pattern.permute.xlu0 0
      %1009 = vperm.xlu0 %1008, %v895
      %v1010 = vpop.permute.xlu0 %1009
      %1013 = vset.pattern.permute.xlu0 0
      %1014 = vperm.xlu0 %1013, %v896
      %v1015 = vpop.permute.xlu0 %1014
      %1018 = vset.pattern.permute.xlu0 0
      %1019 = vperm.xlu0 %1018, %v897
      %v1020 = vpop.permute.xlu0 %1019
      %v1026 = vunpack.c.l.b16 %v890
      %v1027 = vunpack.c.h.b16 %v890
      %v1028 = vunpack.c.l.b16 %v891
      %v1029 = vunpack.c.h.b16 %v891
      %v1030 = vunpack.c.l.b16 %v892
      %v1031 = vunpack.c.h.b16 %v892
      %v1032 = vunpack.c.l.b16 %v893
      %v1033 = vunpack.c.h.b16 %v893
      %v1034 = vpack.c.b16 %v1028, %v1026
      %v1035 = vpack.c.b16 %v1029, %v1027
      %v1036 = vpack.c.b16 %v1032, %v1030
      %v1037 = vpack.c.b16 %v1033, %v1031
      %v1041 = vsel %vm566, %v1035, 0
      %v1044 = vsel %vm566, %v1037, 0
      %1046 = vmatprep.subr.bf16.mxu0 0
      %1047 = vmatpush1.bf16.msra.mxu0 %v1000
      %1048 = vmatprep.subr.bf16.mxu0 0
      %1049 = vmatpush1.bf16.msra.mxu0 %v999
      %1050 = vmatprep.subr.bf16.mxu0 0
      %1051 = vmatpush1.bf16.msra.mxu0 %v998
      %1052 = vmatprep.subr.bf16.mxu0 0
      %1053 = vmatpush1.bf16.msra.mxu0 %v997
      %1054 = vmatprep.subr.bf16.mxu0 0
      %1055 = vmatpush1.bf16.msra.mxu0 %v996
      %1056 = vmatprep.subr.bf16.mxu0 0
      %1057 = vmatpush1.bf16.msra.mxu0 %v995
      %1058 = vmatprep.subr.bf16.mxu0 0
      %1059 = vmatpush1.bf16.msra.mxu0 %v994
      %1060 = vmatprep.subr.bf16.mxu0 0
      %1061 = vmatpush1.bf16.msra.mxu0 %v993
      %1062 = vmatprep.subr.bf16.mxu0 0
      %1063 = vmatpush2.bf16.msra.mxu0 0
      %1064 = vmatprep.subr.bf16.mxu0 0
      %1065 = vmatpush2.bf16.msra.mxu0 0
      %1066 = vmatprep.subr.bf16.mxu0 0
      %1067 = vmatpush2.bf16.msra.mxu0 0
      %1068 = vmatprep.subr.bf16.mxu0 0
      %1069 = vmatpush2.bf16.msra.mxu0 0
      %1070 = vmatprep.subr.bf16.mxu0 0
      %1071 = vmatpush2.bf16.msra.mxu0 0
      %1072 = vmatprep.subr.bf16.mxu0 0
      %1073 = vmatpush2.bf16.msra.mxu0 0
      %1074 = vmatprep.subr.bf16.mxu0 0
      %1075 = vmatpush2.bf16.msra.mxu0 0
      %1076 = vmatprep.subr.bf16.mxu0 0
      %1077 = vmatpush2.bf16.msra.mxu0 %v1001
      %1078 = vmatprep.mubr.bf16.mxu0 %v1041
      %1079 = vmatmul.mubr.bf16.gmra.mxu0 %v1034
      %v1080 = vpop.f32.mrf.mxu0
      %v1081 = vadd.f32 %v1005, %v1080
      %v1082 = vpop.f32.mrf.mxu0
      %v1083 = vpop.f32.mrf.mxu0
      %v1084 = vadd.f32 %v1010, %v1083
      %v1085 = vpop.f32.mrf.mxu0
      %1086 = vmatprep.mubr.bf16.mxu0 %v1044
      %1087 = vmatmul.mubr.bf16.gmra.mxu0 %v1036
      %v1088 = vpop.f32.mrf.mxu0
      %v1089 = vadd.f32 %v1015, %v1088
      %v1090 = vpop.f32.mrf.mxu0
      %v1091 = vpop.f32.mrf.mxu0
      %v1092 = vadd.f32 %v1020, %v1091
      %v1093 = vpop.f32.mrf.mxu0
      %1094 = vdwg.mxu0
      %v1095 = vld [vmem:[%s12] sm:$0xff]
      %v1096 = vld [vmem:[%s12 + $0x8] sm:$0xff]
      %v1097 = vld [vmem:[%s12 + $0x10] sm:$0xff]
      %v1098 = vld [vmem:[%s12 + $0x18] sm:$0xff]
      %v1099 = vld [vmem:[%s12 + $0x20] sm:$0xff]
      %v1100 = vld [vmem:[%s12 + $0x28] sm:$0xff]
      %v1101 = vld [vmem:[%s12 + $0x30] sm:$0xff]
      %v1102 = vld [vmem:[%s12 + $0x38] sm:$0xff]
      %1107 = vrot.lane.b32.xlu0 %v1081, 127
      %v1108 = vpop.permute.xlu0 %1107
      %1109 = vrot.lane.b32.xlu0 %v1084, 127
      %v1110 = vpop.permute.xlu0 %1109
      %1111 = vrot.lane.b32.xlu0 %v1089, 127
      %v1112 = vpop.permute.xlu0 %1111
      %1113 = vrot.lane.b32.xlu0 %v1092, 127
      %v1114 = vpop.permute.xlu0 %1113
      %v1119 = vsel %vm932, %v1108, 0.0
      %v1120 = vsel %vm932, %v1110, 0.0
      %v1121 = vsel %vm932, %v1112, 0.0
      %v1122 = vsel %vm932, %v1114, 0.0
      %v1123 = vmax.f32 %v1081, %v1119
      %v1124 = vmax.f32 %v1084, %v1120
      %v1125 = vmax.f32 %v1089, %v1121
      %v1126 = vmax.f32 %v1092, %v1122
      %1131 = vrot.lane.b32.xlu0 %v1123, 120
      %v1132 = vpop.permute.xlu0 %1131
      %1133 = vrot.lane.b32.xlu0 %v1124, 120
      %v1134 = vpop.permute.xlu0 %1133
      %1135 = vrot.lane.b32.xlu0 %v1125, 120
      %v1136 = vpop.permute.xlu0 %1135
      %1137 = vrot.lane.b32.xlu0 %v1126, 120
      %v1138 = vpop.permute.xlu0 %1137
      %v1143 = vsel %vm974, %v1132, 0.0
      %v1144 = vsel %vm974, %v1134, 0.0
      %v1145 = vsel %vm974, %v1136, 0.0
      %v1146 = vsel %vm974, %v1138, 0.0
      %v1147 = vmax.f32 %v1123, %v1143
      %v1148 = vmax.f32 %v1124, %v1144
      %v1149 = vmax.f32 %v1125, %v1145
      %v1150 = vmax.f32 %v1126, %v1146
      %vm1151 = vcmask 523264
      %v1153 = vsel %vm1151, %v1147, 0
      %v1156 = vsel %vm1151, %v1148, 0
      %v1159 = vsel %vm1151, %v1149, 0
      %v1162 = vsel %vm1151, %v1150, 0
      %1164 = vmatprep.subr.mxu0 0.0
      %1165 = vmatpush1.msra.mxu0 0.0
      %1166 = vmatprep.subr.mxu0 0.0
      %1167 = vmatpush1.msra.mxu0 0.0
      %1168 = vmatprep.subr.mxu0 0.0
      %1169 = vmatpush1.msra.mxu0 0.0
      %1170 = vmatprep.subr.mxu0 0.0
      %1171 = vmatpush1.msra.mxu0 0.0
      %1172 = vmatprep.subr.mxu0 0.0
      %1173 = vmatpush1.msra.mxu0 0.0
      %1174 = vmatprep.subr.mxu0 0.0
      %1175 = vmatpush1.msra.mxu0 0.0
      %1176 = vmatprep.subr.mxu0 0.0
      %1177 = vmatpush1.msra.mxu0 0.0
      %1178 = vmatprep.subr.mxu0 0.0
      %1179 = vmatpush1.msra.mxu0 0.0
      %1180 = vmatprep.subr.mxu0 0.0
      %1181 = vmatpush1.msra.mxu0 %v1102
      %1182 = vmatprep.subr.mxu0 0.0
      %1183 = vmatpush1.msra.mxu0 %v1101
      %1184 = vmatprep.subr.mxu0 0.0
      %1185 = vmatpush1.msra.mxu0 %v1100
      %1186 = vmatprep.subr.mxu0 0.0
      %1187 = vmatpush1.msra.mxu0 %v1099
      %1188 = vmatprep.subr.mxu0 0.0
      %1189 = vmatpush1.msra.mxu0 %v1098
      %1190 = vmatprep.subr.mxu0 0.0
      %1191 = vmatpush1.msra.mxu0 %v1097
      %1192 = vmatprep.subr.mxu0 0.0
      %1193 = vmatpush1.msra.mxu0 %v1096
      %1194 = vmatprep.subr.mxu0 0.0
      %1195 = vmatpush1.msra.mxu0 %v1095
      %1196 = vmatprep.subr.mxu0 0.0
      %1197 = vmatpush2.msra.mxu0 0.0
      %1198 = vmatprep.subr.mxu0 0.0
      %1199 = vmatpush2.msra.mxu0 0.0
      %1200 = vmatprep.subr.mxu0 0.0
      %1201 = vmatpush2.msra.mxu0 0.0
      %1202 = vmatprep.subr.mxu0 0.0
      %1203 = vmatpush2.msra.mxu0 0.0
      %1204 = vmatprep.subr.mxu0 0.0
      %1205 = vmatpush2.msra.mxu0 0.0
      %1206 = vmatprep.subr.mxu0 0.0
      %1207 = vmatpush2.msra.mxu0 0.0
      %1208 = vmatprep.subr.mxu0 0.0
      %1209 = vmatpush2.msra.mxu0 0.0
      %1210 = vmatprep.subr.mxu0 0.0
      %1211 = vmatpush2.msra.mxu0 0.0
      %1212 = vmatprep.subr.mxu0 0.0
      %1213 = vmatpush2.msra.mxu0 0.0
      %1214 = vmatprep.subr.mxu0 0.0
      %1215 = vmatpush2.msra.mxu0 0.0
      %1216 = vmatprep.subr.mxu0 0.0
      %1217 = vmatpush2.msra.mxu0 0.0
      %1218 = vmatprep.subr.mxu0 0.0
      %1219 = vmatpush2.msra.mxu0 0.0
      %1220 = vmatprep.subr.mxu0 0.0
      %1221 = vmatpush2.msra.mxu0 0.0
      %1222 = vmatprep.subr.mxu0 0.0
      %1223 = vmatpush2.msra.mxu0 0.0
      %1224 = vmatprep.subr.mxu0 0.0
      %1225 = vmatpush2.msra.mxu0 0.0
      %1226 = vmatprep.subr.mxu0 0.0
      %1227 = vmatpush2.msra.mxu0 0.0
      %1228 = vmatprep.mubr.f32.mxu0 0.0
      %1229 = vmatmul.mubr.f32.gmra.mxu0 %v1153
      %v1230 = vpop.f32.mrf.mxu0
      %v1231 = vadd.f32 0.0, %v1230
      %v1232 = vpop.f32.mrf.mxu0
      %1233 = vmatprep.mubr.f32.mxu0 0.0
      %1234 = vmatmul.mubr.f32.gmra.mxu0 %v1156
      %v1235 = vpop.f32.mrf.mxu0
      %v1236 = vadd.f32 0.0, %v1235
      %v1237 = vpop.f32.mrf.mxu0
      %1238 = vmatprep.mubr.f32.mxu0 0.0
      %1239 = vmatmul.mubr.f32.gmra.mxu0 %v1159
      %v1240 = vpop.f32.mrf.mxu0
      %v1241 = vadd.f32 0.0, %v1240
      %v1242 = vpop.f32.mrf.mxu0
      %1243 = vmatprep.mubr.f32.mxu0 0.0
      %1244 = vmatmul.mubr.f32.gmra.mxu0 %v1162
      %v1245 = vpop.f32.mrf.mxu0
      %v1246 = vadd.f32 0.0, %v1245
      %v1247 = vpop.f32.mrf.mxu0
      %1248 = vdwg.mxu0
      %v1249 = vmax.f32 %v1231, 0.0
      %v1250 = vmax.f32 %v1236, 0.0
      %v1251 = vmax.f32 %v1241, 0.0
      %v1252 = vmax.f32 %v1246, 0.0
      %v1253 = vld [vmem:[%s5] sm:$0xff]
      %v1254 = vld [vmem:[%s5 + $0x8] sm:$0xf]
      %v1255 = vld [vmem:[%s5 + $0xc] sm:$0xff]
      %v1256 = vld [vmem:[%s5 + $0x14] sm:$0xf]
      %v1257 = vld [vmem:[%s6] sm:$0xff]
      %v1258 = vld [vmem:[%s6 + $0x8] sm:$0xff]
      %vm1259 = vcmp.lt.s32.totalorder %v499, 0
      %v1260 = vsub.s32 0, %v499
      %v1261 = vsel %vm1259, %v1260, %v499
      %v1262 = vshrl.u32 %v1261, 2
      %v1263 = vand.u32 %v1261, 3
      %v1264 = vsub.s32 0, %v1263
      %v1265 = vsel %vm1259, %v1264, %v1263
      %vm1266 = vcmp.ne.s32.totalorder %v1265, 0
      %vm1267 = vcmp.lt.s32.totalorder %v1265, 0
      %vm1268 = vmand %vm1267, %vm1266
      %v1269 = vadd.s32 %v1265, 4
      %v1270 = vsel %vm1268, %v1269, %v1265
      %vm1271 = vcmp.gt.s32.totalorder %v1270, 0
      %vm1272 = vcmp.lt.s32.totalorder %v1270, 3
      %1277 = vrot.lane.b32.xlu0 %v1249, 1
      %v1278 = vpop.permute.xlu0 %1277
      %1279 = vrot.lane.b32.xlu0 %v1250, 1
      %v1280 = vpop.permute.xlu0 %1279
      %1281 = vrot.lane.b32.xlu0 %v1251, 1
      %v1282 = vpop.permute.xlu0 %1281
      %1283 = vrot.lane.b32.xlu0 %v1252, 1
      %v1284 = vpop.permute.xlu0 %1283
      %v1289 = vsel %vm542, 0.0, %v1278
      %v1290 = vsel %vm542, 0.0, %v1280
      %v1291 = vsel %vm542, 0.0, %v1282
      %v1292 = vsel %vm542, 0.0, %v1284
      %v1293 = vsel %vm1271, 1, 0
      %vm1294 = vcmp.eq.s32.totalorder %v1293, 1
      %v1295 = vsel %vm1294, %v1289, 0.0
      %v1296 = vsel %vm1294, %v1290, 0.0
      %v1297 = vsel %vm1294, %v1291, 0.0
      %v1298 = vsel %vm1294, %v1292, 0.0
      %1299 = vrot.lane.b32.xlu0 %v1249, 127
      %v1300 = vpop.permute.xlu0 %1299
      %1301 = vrot.lane.b32.xlu0 %v1250, 127
      %v1302 = vpop.permute.xlu0 %1301
      %1303 = vrot.lane.b32.xlu0 %v1251, 127
      %v1304 = vpop.permute.xlu0 %1303
      %1305 = vrot.lane.b32.xlu0 %v1252, 127
      %v1306 = vpop.permute.xlu0 %1305
      %vm1311 = vcmask 121856
      %v1312 = vsel %vm1311, %v1300, 0.0
      %v1313 = vsel %vm1311, %v1302, 0.0
      %v1314 = vsel %vm1311, %v1304, 0.0
      %v1315 = vsel %vm1311, %v1306, 0.0
      %v1316 = vsel %vm1272, 1, 0
      %vm1317 = vcmp.eq.s32.totalorder %v1316, 1
      %v1318 = vsel %vm1317, %v1312, 0.0
      %v1319 = vsel %vm1317, %v1313, 0.0
      %v1320 = vsel %vm1317, %v1314, 0.0
      %v1321 = vsel %vm1317, %v1315, 0.0
      %1326 = vrot.lane.b32.xlu0 %v1295, 4
      %v1327 = vpop.permute.xlu0 %1326
      %1328 = vrot.lane.b32.xlu0 %v1296, 4
      %v1329 = vpop.permute.xlu0 %1328
      %1330 = vrot.lane.b32.xlu0 %v1297, 4
      %v1331 = vpop.permute.xlu0 %1330
      %1332 = vrot.lane.b32.xlu0 %v1298, 4
      %v1333 = vpop.permute.xlu0 %1332
      %vm1338 = vcmask 31744
      %v1339 = vsel %vm1338, 0.0, %v1327
      %v1340 = vsel %vm1338, 0.0, %v1329
      %v1341 = vsel %vm1338, 0.0, %v1331
      %v1342 = vsel %vm1338, 0.0, %v1333
      %1343 = vrot.lane.b32.xlu0 %v1249, 4
      %v1344 = vpop.permute.xlu0 %1343
      %1345 = vrot.lane.b32.xlu0 %v1250, 4
      %v1346 = vpop.permute.xlu0 %1345
      %1347 = vrot.lane.b32.xlu0 %v1251, 4
      %v1348 = vpop.permute.xlu0 %1347
      %1349 = vrot.lane.b32.xlu0 %v1252, 4
      %v1350 = vpop.permute.xlu0 %1349
      %v1355 = vsel %vm1338, 0.0, %v1344
      %v1356 = vsel %vm1338, 0.0, %v1346
      %v1357 = vsel %vm1338, 0.0, %v1348
      %v1358 = vsel %vm1338, 0.0, %v1350
      %1363 = vrot.lane.b32.xlu0 %v1318, 4
      %v1364 = vpop.permute.xlu0 %1363
      %1365 = vrot.lane.b32.xlu0 %v1319, 4
      %v1366 = vpop.permute.xlu0 %1365
      %1367 = vrot.lane.b32.xlu0 %v1320, 4
      %v1368 = vpop.permute.xlu0 %1367
      %1369 = vrot.lane.b32.xlu0 %v1321, 4
      %v1370 = vpop.permute.xlu0 %1369
      %v1375 = vsel %vm1338, 0.0, %v1364
      %v1376 = vsel %vm1338, 0.0, %v1366
      %v1377 = vsel %vm1338, 0.0, %v1368
      %v1378 = vsel %vm1338, 0.0, %v1370
      %1379 = vrot.lane.b32.xlu0 %v1295, 124
      %v1380 = vpop.permute.xlu0 %1379
      %1381 = vrot.lane.b32.xlu0 %v1296, 124
      %v1382 = vpop.permute.xlu0 %1381
      %1383 = vrot.lane.b32.xlu0 %v1297, 124
      %v1384 = vpop.permute.xlu0 %1383
      %1385 = vrot.lane.b32.xlu0 %v1298, 124
      %v1386 = vpop.permute.xlu0 %1385
      %vm1391 = vcmask 97280
      %v1392 = vsel %vm1391, %v1380, 0.0
      %v1393 = vsel %vm1391, %v1382, 0.0
      %v1394 = vsel %vm1391, %v1384, 0.0
      %v1395 = vsel %vm1391, %v1386, 0.0
      %1396 = vrot.lane.b32.xlu0 %v1249, 124
      %v1397 = vpop.permute.xlu0 %1396
      %1398 = vrot.lane.b32.xlu0 %v1250, 124
      %v1399 = vpop.permute.xlu0 %1398
      %1400 = vrot.lane.b32.xlu0 %v1251, 124
      %v1401 = vpop.permute.xlu0 %1400
      %1402 = vrot.lane.b32.xlu0 %v1252, 124
      %v1403 = vpop.permute.xlu0 %1402
      %v1408 = vsel %vm1391, %v1397, 0.0
      %v1409 = vsel %vm1391, %v1399, 0.0
      %v1410 = vsel %vm1391, %v1401, 0.0
      %v1411 = vsel %vm1391, %v1403, 0.0
      %1412 = vrot.lane.b32.xlu0 %v1318, 124
      %v1413 = vpop.permute.xlu0 %1412
      %1414 = vrot.lane.b32.xlu0 %v1319, 124
      %v1415 = vpop.permute.xlu0 %1414
      %1416 = vrot.lane.b32.xlu0 %v1320, 124
      %v1417 = vpop.permute.xlu0 %1416
      %1418 = vrot.lane.b32.xlu0 %v1321, 124
      %v1419 = vpop.permute.xlu0 %1418
      %v1424 = vsel %vm1391, %v1413, 0.0
      %v1425 = vsel %vm1391, %v1415, 0.0
      %v1426 = vsel %vm1391, %v1417, 0.0
      %v1427 = vsel %vm1391, %v1419, 0.0
      %v1428 = vpack.c.bf16 %v1340, %v1339
      %v1429 = vpack.c.bf16 %v1342, %v1341
      %v1430 = vpack.c.bf16 %v1356, %v1355
      %v1431 = vpack.c.bf16 %v1358, %v1357
      %v1432 = vpack.c.bf16 %v1376, %v1375
      %v1433 = vpack.c.bf16 %v1378, %v1377
      %v1434 = vpack.c.bf16 %v1296, %v1295
      %v1435 = vpack.c.bf16 %v1298, %v1297
      %v1436 = vpack.c.bf16 %v1250, %v1249
      %v1437 = vpack.c.bf16 %v1252, %v1251
      %v1438 = vpack.c.bf16 %v1319, %v1318
      %v1439 = vpack.c.bf16 %v1321, %v1320
      %v1440 = vpack.c.bf16 %v1393, %v1392
      %v1441 = vpack.c.bf16 %v1395, %v1394
      %v1442 = vpack.c.bf16 %v1409, %v1408
      %v1443 = vpack.c.bf16 %v1411, %v1410
      %v1444 = vpack.c.bf16 %v1425, %v1424
      %v1445 = vpack.c.bf16 %v1427, %v1426
      %1447 = vset.pattern.permute.xlu0 0
      %1448 = vperm.xlu0 %1447, %v1257
      %v1449 = vpop.permute.xlu0 %1448
      %1452 = vset.pattern.permute.xlu0 0
      %1453 = vperm.xlu0 %1452, %v1258
      %v1454 = vpop.permute.xlu0 %1453
      %v1460 = vunpack.c.l.b16 %v1253
      %v1461 = vunpack.c.h.b16 %v1253
      %v1462 = vunpack.c.l.b16 %v1254
      %v1463 = vunpack.c.l.b16 %v1255
      %v1464 = vunpack.c.h.b16 %v1255
      %v1465 = vunpack.c.l.b16 %v1256
      %v1466 = vpack.c.b16 %v1463, %v1460
      %v1467 = vpack.c.b16 %v1464, %v1461
      %v1468 = vpack.c.b16 %v1465, %v1462
      %vm1471 = vcmask 261120
      %v1473 = vsel %vm1471, %v1468, 0
      %1475 = vmatprep.subr.bf16.mxu0 0
      %1476 = vmatpush1.bf16.msra.mxu0 %v1435
      %1477 = vmatprep.subr.bf16.mxu0 0
      %1478 = vmatpush1.bf16.msra.mxu0 %v1434
      %1479 = vmatprep.subr.bf16.mxu0 0
      %1480 = vmatpush1.bf16.msra.mxu0 %v1433
      %1481 = vmatprep.subr.bf16.mxu0 0
      %1482 = vmatpush1.bf16.msra.mxu0 %v1432
      %1483 = vmatprep.subr.bf16.mxu0 0
      %1484 = vmatpush1.bf16.msra.mxu0 %v1431
      %1485 = vmatprep.subr.bf16.mxu0 0
      %1486 = vmatpush1.bf16.msra.mxu0 %v1430
      %1487 = vmatprep.subr.bf16.mxu0 0
      %1488 = vmatpush1.bf16.msra.mxu0 %v1429
      %1489 = vmatprep.subr.bf16.mxu0 0
      %1490 = vmatpush1.bf16.msra.mxu0 %v1428
      %1491 = vmatprep.subr.bf16.mxu0 0
      %1492 = vmatpush2.bf16.msra.mxu0 %v1443
      %1493 = vmatprep.subr.bf16.mxu0 0
      %1494 = vmatpush2.bf16.msra.mxu0 %v1442
      %1495 = vmatprep.subr.bf16.mxu0 0
      %1496 = vmatpush2.bf16.msra.mxu0 %v1441
      %1497 = vmatprep.subr.bf16.mxu0 0
      %1498 = vmatpush2.bf16.msra.mxu0 %v1440
      %1499 = vmatprep.subr.bf16.mxu0 0
      %1500 = vmatpush2.bf16.msra.mxu0 %v1439
      %1501 = vmatprep.subr.bf16.mxu0 0
      %1502 = vmatpush2.bf16.msra.mxu0 %v1438
      %1503 = vmatprep.subr.bf16.mxu0 0
      %1504 = vmatpush2.bf16.msra.mxu0 %v1437
      %1505 = vmatprep.subr.bf16.mxu0 0
      %1506 = vmatpush2.bf16.msra.mxu0 %v1436
      %1507 = vmatprep.mubr.bf16.mxu0 %v1467
      %1508 = vmatmul.mubr.bf16.gmra.mxu0 %v1466
      %v1509 = vpop.f32.mrf.mxu0
      %v1510 = vadd.f32 %v1449, %v1509
      %v1511 = vpop.f32.mrf.mxu0
      %v1512 = vpop.f32.mrf.mxu0
      %v1513 = vadd.f32 %v1454, %v1512
      %v1514 = vpop.f32.mrf.mxu0
      %1515 = vdwg.mxu0
      %1516 = vmatprep.subr.bf16.mxu0 0
      %1517 = vmatpush1.bf16.msra.mxu0 0
      %1518 = vmatprep.subr.bf16.mxu0 0
      %1519 = vmatpush1.bf16.msra.mxu0 0
      %1520 = vmatprep.subr.bf16.mxu0 0
      %1521 = vmatpush1.bf16.msra.mxu0 0
      %1522 = vmatprep.subr.bf16.mxu0 0
      %1523 = vmatpush1.bf16.msra.mxu0 0
      %1524 = vmatprep.subr.bf16.mxu0 0
      %1525 = vmatpush1.bf16.msra.mxu0 0
      %1526 = vmatprep.subr.bf16.mxu0 0
      %1527 = vmatpush1.bf16.msra.mxu0 0
      %1528 = vmatprep.subr.bf16.mxu0 0
      %1529 = vmatpush1.bf16.msra.mxu0 %v1445
      %1530 = vmatprep.subr.bf16.mxu0 0
      %1531 = vmatpush1.bf16.msra.mxu0 %v1444
      %1532 = vmatprep.subr.bf16.mxu0 0
      %1533 = vmatpush2.bf16.msra.mxu0 0
      %1534 = vmatprep.subr.bf16.mxu0 0
      %1535 = vmatpush2.bf16.msra.mxu0 0
      %1536 = vmatprep.subr.bf16.mxu0 0
      %1537 = vmatpush2.bf16.msra.mxu0 0
      %1538 = vmatprep.subr.bf16.mxu0 0
      %1539 = vmatpush2.bf16.msra.mxu0 0
      %1540 = vmatprep.subr.bf16.mxu0 0
      %1541 = vmatpush2.bf16.msra.mxu0 0
      %1542 = vmatprep.subr.bf16.mxu0 0
      %1543 = vmatpush2.bf16.msra.mxu0 0
      %1544 = vmatprep.subr.bf16.mxu0 0
      %1545 = vmatpush2.bf16.msra.mxu0 0
      %1546 = vmatprep.subr.bf16.mxu0 0
      %1547 = vmatpush2.bf16.msra.mxu0 0
      %1548 = vmatprep.mubr.bf16.mxu0 0
      %1549 = vmatmul.mubr.bf16.gmra.mxu0 %v1473
      %v1550 = vpop.f32.mrf.mxu0
      %v1551 = vadd.f32 %v1510, %v1550
      %v1552 = vpop.f32.mrf.mxu0
      %v1553 = vpop.f32.mrf.mxu0
      %v1554 = vadd.f32 %v1513, %v1553
      %v1555 = vpop.f32.mrf.mxu0
      %1556 = vdwg.mxu0
      %v1557 = vld [vmem:[%s13] sm:$0xff]
      %v1558 = vld [vmem:[%s13 + $0x8] sm:$0xff]
      %v1559 = vmax.f32 %v1551, 0.0
      %v1560 = vmax.f32 %v1554, 0.0
      %v1562 = vsel %vm566, %v1559, 0
      %v1565 = vsel %vm566, %v1560, 0
      %1567 = vmatprep.subr.mxu0 0.0
      %1568 = vmatpush1.msra.mxu0 0.0
      %1569 = vmatprep.subr.mxu0 0.0
      %1570 = vmatpush1.msra.mxu0 0.0
      %1571 = vmatprep.subr.mxu0 0.0
      %1572 = vmatpush1.msra.mxu0 0.0
      %1573 = vmatprep.subr.mxu0 0.0
      %1574 = vmatpush1.msra.mxu0 0.0
      %1575 = vmatprep.subr.mxu0 0.0
      %1576 = vmatpush1.msra.mxu0 0.0
      %1577 = vmatprep.subr.mxu0 0.0
      %1578 = vmatpush1.msra.mxu0 0.0
      %1579 = vmatprep.subr.mxu0 0.0
      %1580 = vmatpush1.msra.mxu0 0.0
      %1581 = vmatprep.subr.mxu0 0.0
      %1582 = vmatpush1.msra.mxu0 0.0
      %1583 = vmatprep.subr.mxu0 0.0
      %1584 = vmatpush1.msra.mxu0 0.0
      %1585 = vmatprep.subr.mxu0 0.0
      %1586 = vmatpush1.msra.mxu0 0.0
      %1587 = vmatprep.subr.mxu0 0.0
      %1588 = vmatpush1.msra.mxu0 0.0
      %1589 = vmatprep.subr.mxu0 0.0
      %1590 = vmatpush1.msra.mxu0 0.0
      %1591 = vmatprep.subr.mxu0 0.0
      %1592 = vmatpush1.msra.mxu0 0.0
      %1593 = vmatprep.subr.mxu0 0.0
      %1594 = vmatpush1.msra.mxu0 0.0
      %1595 = vmatprep.subr.mxu0 0.0
      %1596 = vmatpush1.msra.mxu0 %v1558
      %1597 = vmatprep.subr.mxu0 0.0
      %1598 = vmatpush1.msra.mxu0 %v1557
      %1599 = vmatprep.subr.mxu0 0.0
      %1600 = vmatpush2.msra.mxu0 0.0
      %1601 = vmatprep.subr.mxu0 0.0
      %1602 = vmatpush2.msra.mxu0 0.0
      %1603 = vmatprep.subr.mxu0 0.0
      %1604 = vmatpush2.msra.mxu0 0.0
      %1605 = vmatprep.subr.mxu0 0.0
      %1606 = vmatpush2.msra.mxu0 0.0
      %1607 = vmatprep.subr.mxu0 0.0
      %1608 = vmatpush2.msra.mxu0 0.0
      %1609 = vmatprep.subr.mxu0 0.0
      %1610 = vmatpush2.msra.mxu0 0.0
      %1611 = vmatprep.subr.mxu0 0.0
      %1612 = vmatpush2.msra.mxu0 0.0
      %1613 = vmatprep.subr.mxu0 0.0
      %1614 = vmatpush2.msra.mxu0 0.0
      %1615 = vmatprep.subr.mxu0 0.0
      %1616 = vmatpush2.msra.mxu0 0.0
      %1617 = vmatprep.subr.mxu0 0.0
      %1618 = vmatpush2.msra.mxu0 0.0
      %1619 = vmatprep.subr.mxu0 0.0
      %1620 = vmatpush2.msra.mxu0 0.0
      %1621 = vmatprep.subr.mxu0 0.0
      %1622 = vmatpush2.msra.mxu0 0.0
      %1623 = vmatprep.subr.mxu0 0.0
      %1624 = vmatpush2.msra.mxu0 0.0
      %1625 = vmatprep.subr.mxu0 0.0
      %1626 = vmatpush2.msra.mxu0 0.0
      %1627 = vmatprep.subr.mxu0 0.0
      %1628 = vmatpush2.msra.mxu0 0.0
      %1629 = vmatprep.subr.mxu0 0.0
      %1630 = vmatpush2.msra.mxu0 0.0
      %1631 = vmatprep.mubr.f32.mxu0 0.0
      %1632 = vmatmul.mubr.f32.gmra.mxu0 %v1562
      %v1633 = vpop.f32.mrf.mxu0
      %v1634 = vadd.f32 0.0, %v1633
      %v1635 = vpop.f32.mrf.mxu0
      %1636 = vmatprep.mubr.f32.mxu0 0.0
      %1637 = vmatmul.mubr.f32.gmra.mxu0 %v1565
      %v1638 = vpop.f32.mrf.mxu0
      %v1639 = vadd.f32 0.0, %v1638
      %v1640 = vpop.f32.mrf.mxu0
      %1641 = vdwg.mxu0
      %v1642 = vld [vmem:[%s7] sm:$0xff]
      %v1643 = vld [vmem:[%s7 + $0x8] sm:$0xff]
      %v1644 = vld [vmem:[%s8] sm:$0xff]
      %v1645 = vld [vmem:[%s8 + $0x8] sm:$0xff]
      %1648 = vrot.lane.b32.xlu0 %v1634, 1
      %v1649 = vpop.permute.xlu0 %1648
      %1650 = vrot.lane.b32.xlu0 %v1639, 1
      %v1651 = vpop.permute.xlu0 %1650
      %v1654 = vsel %vm542, 0.0, %v1649
      %v1655 = vsel %vm542, 0.0, %v1651
      %v1656 = vsel %vm923, %v1654, 0.0
      %v1657 = vsel %vm923, %v1655, 0.0
      %1658 = vrot.lane.b32.xlu0 %v1634, 127
      %v1659 = vpop.permute.xlu0 %1658
      %1660 = vrot.lane.b32.xlu0 %v1639, 127
      %v1661 = vpop.permute.xlu0 %1660
      %v1664 = vsel %vm932, %v1659, 0.0
      %v1665 = vsel %vm932, %v1661, 0.0
      %v1666 = vsel %vm936, %v1664, 0.0
      %v1667 = vsel %vm936, %v1665, 0.0
      %1670 = vrot.lane.b32.xlu0 %v1656, 8
      %v1671 = vpop.permute.xlu0 %1670
      %1672 = vrot.lane.b32.xlu0 %v1657, 8
      %v1673 = vpop.permute.xlu0 %1672
      %v1676 = vsel %vm947, 0.0, %v1671
      %v1677 = vsel %vm947, 0.0, %v1673
      %1678 = vrot.lane.b32.xlu0 %v1634, 8
      %v1679 = vpop.permute.xlu0 %1678
      %1680 = vrot.lane.b32.xlu0 %v1639, 8
      %v1681 = vpop.permute.xlu0 %1680
      %v1684 = vsel %vm947, 0.0, %v1679
      %v1685 = vsel %vm947, 0.0, %v1681
      %1688 = vrot.lane.b32.xlu0 %v1666, 8
      %v1689 = vpop.permute.xlu0 %1688
      %1690 = vrot.lane.b32.xlu0 %v1667, 8
      %v1691 = vpop.permute.xlu0 %1690
      %v1694 = vsel %vm947, 0.0, %v1689
      %v1695 = vsel %vm947, 0.0, %v1691
      %1696 = vrot.lane.b32.xlu0 %v1656, 120
      %v1697 = vpop.permute.xlu0 %1696
      %1698 = vrot.lane.b32.xlu0 %v1657, 120
      %v1699 = vpop.permute.xlu0 %1698
      %v1702 = vsel %vm974, %v1697, 0.0
      %v1703 = vsel %vm974, %v1699, 0.0
      %1704 = vrot.lane.b32.xlu0 %v1634, 120
      %v1705 = vpop.permute.xlu0 %1704
      %1706 = vrot.lane.b32.xlu0 %v1639, 120
      %v1707 = vpop.permute.xlu0 %1706
      %v1710 = vsel %vm974, %v1705, 0.0
      %v1711 = vsel %vm974, %v1707, 0.0
      %1712 = vrot.lane.b32.xlu0 %v1666, 120
      %v1713 = vpop.permute.xlu0 %1712
      %1714 = vrot.lane.b32.xlu0 %v1667, 120
      %v1715 = vpop.permute.xlu0 %1714
      %v1718 = vsel %vm974, %v1713, 0.0
      %v1719 = vsel %vm974, %v1715, 0.0
      %v1720 = vpack.c.bf16 %v1677, %v1676
      %v1721 = vpack.c.bf16 %v1685, %v1684
      %v1722 = vpack.c.bf16 %v1695, %v1694
      %v1723 = vpack.c.bf16 %v1657, %v1656
      %v1724 = vpack.c.bf16 %v1639, %v1634
      %v1725 = vpack.c.bf16 %v1667, %v1666
      %v1726 = vpack.c.bf16 %v1703, %v1702
      %v1727 = vpack.c.bf16 %v1711, %v1710
      %v1728 = vpack.c.bf16 %v1719, %v1718
      %1730 = vset.pattern.permute.xlu0 0
      %1731 = vperm.xlu0 %1730, %v1644
      %v1732 = vpop.permute.xlu0 %1731
      %1735 = vset.pattern.permute.xlu0 0
      %1736 = vperm.xlu0 %1735, %v1645
      %v1737 = vpop.permute.xlu0 %1736
      %v1741 = vunpack.c.l.b16 %v1642
      %v1742 = vunpack.c.h.b16 %v1642
      %v1743 = vunpack.c.l.b16 %v1643
      %v1744 = vunpack.c.h.b16 %v1643
      %v1745 = vpack.c.b16 %v1743, %v1741
      %v1746 = vpack.c.b16 %v1744, %v1742
      %v1749 = vsel %vm566, %v1746, 0
      %1751 = vmatprep.subr.bf16.mxu0 0
      %1752 = vmatpush1.bf16.msra.mxu0 %v1727
      %1753 = vmatprep.subr.bf16.mxu0 0
      %1754 = vmatpush1.bf16.msra.mxu0 %v1726
      %1755 = vmatprep.subr.bf16.mxu0 0
      %1756 = vmatpush1.bf16.msra.mxu0 %v1725
      %1757 = vmatprep.subr.bf16.mxu0 0
      %1758 = vmatpush1.bf16.msra.mxu0 %v1724
      %1759 = vmatprep.subr.bf16.mxu0 0
      %1760 = vmatpush1.bf16.msra.mxu0 %v1723
      %1761 = vmatprep.subr.bf16.mxu0 0
      %1762 = vmatpush1.bf16.msra.mxu0 %v1722
      %1763 = vmatprep.subr.bf16.mxu0 0
      %1764 = vmatpush1.bf16.msra.mxu0 %v1721
      %1765 = vmatprep.subr.bf16.mxu0 0
      %1766 = vmatpush1.bf16.msra.mxu0 %v1720
      %1767 = vmatprep.subr.bf16.mxu0 0
      %1768 = vmatpush2.bf16.msra.mxu0 0
      %1769 = vmatprep.subr.bf16.mxu0 0
      %1770 = vmatpush2.bf16.msra.mxu0 0
      %1771 = vmatprep.subr.bf16.mxu0 0
      %1772 = vmatpush2.bf16.msra.mxu0 0
      %1773 = vmatprep.subr.bf16.mxu0 0
      %1774 = vmatpush2.bf16.msra.mxu0 0
      %1775 = vmatprep.subr.bf16.mxu0 0
      %1776 = vmatpush2.bf16.msra.mxu0 0
      %1777 = vmatprep.subr.bf16.mxu0 0
      %1778 = vmatpush2.bf16.msra.mxu0 0
      %1779 = vmatprep.subr.bf16.mxu0 0
      %1780 = vmatpush2.bf16.msra.mxu0 0
      %1781 = vmatprep.subr.bf16.mxu0 0
      %1782 = vmatpush2.bf16.msra.mxu0 %v1728
      %1783 = vmatprep.mubr.bf16.mxu0 %v1749
      %1784 = vmatmul.mubr.bf16.gmra.mxu0 %v1745
      %v1785 = vpop.f32.mrf.mxu0
      %v1786 = vadd.f32 %v1732, %v1785
      %v1787 = vpop.f32.mrf.mxu0
      %v1788 = vpop.f32.mrf.mxu0
      %v1789 = vadd.f32 %v1737, %v1788
      %v1790 = vpop.f32.mrf.mxu0
      %1791 = vdwg.mxu0
      %v1792 = vld [vmem:[%s14] sm:$0xff]
      %v1793 = vld [vmem:[%s14 + $0x8] sm:$0xff]
      %v1794 = vld [vmem:[%s14 + $0x10] sm:$0xff]
      %v1795 = vld [vmem:[%s14 + $0x18] sm:$0xff]
      %v1796 = vld [vmem:[%s14 + $0x20] sm:$0xff]
      %v1797 = vld [vmem:[%s14 + $0x28] sm:$0xff]
      %v1798 = vld [vmem:[%s14 + $0x30] sm:$0xff]
      %v1799 = vld [vmem:[%s14 + $0x38] sm:$0xff]
      %v1800 = vld [vmem:[%s14 + $0x40] sm:$0xff]
      %v1801 = vld [vmem:[%s14 + $0x48] sm:$0xff]
      %v1802 = vld [vmem:[%s14 + $0x50] sm:$0xff]
      %v1803 = vld [vmem:[%s14 + $0x58] sm:$0xff]
      %v1804 = vld [vmem:[%s14 + $0x60] sm:$0xff]
      %v1805 = vld [vmem:[%s14 + $0x68] sm:$0xff]
      %v1806 = vld [vmem:[%s14 + $0x70] sm:$0xff]
      %v1807 = vld [vmem:[%s14 + $0x78] sm:$0xff]
      %v1808 = vmax.f32 %v1786, 0.0
      %v1809 = vmax.f32 %v1789, 0.0
      %v1811 = vsel %vm1151, %v1808, 0
      %v1814 = vsel %vm1151, %v1809, 0
      %1816 = vmatprep.subr.mxu0 0.0
      %1817 = vmatpush1.msra.mxu0 0.0
      %1818 = vmatprep.subr.mxu0 0.0
      %1819 = vmatpush1.msra.mxu0 0.0
      %1820 = vmatprep.subr.mxu0 0.0
      %1821 = vmatpush1.msra.mxu0 0.0
      %1822 = vmatprep.subr.mxu0 0.0
      %1823 = vmatpush1.msra.mxu0 0.0
      %1824 = vmatprep.subr.mxu0 0.0
      %1825 = vmatpush1.msra.mxu0 0.0
      %1826 = vmatprep.subr.mxu0 0.0
      %1827 = vmatpush1.msra.mxu0 0.0
      %1828 = vmatprep.subr.mxu0 0.0
      %1829 = vmatpush1.msra.mxu0 0.0
      %1830 = vmatprep.subr.mxu0 0.0
      %1831 = vmatpush1.msra.mxu0 0.0
      %1832 = vmatprep.subr.mxu0 %v1807
      %1833 = vmatpush1.msra.mxu0 %v1806
      %1834 = vmatprep.subr.mxu0 %v1805
      %1835 = vmatpush1.msra.mxu0 %v1804
      %1836 = vmatprep.subr.mxu0 %v1803
      %1837 = vmatpush1.msra.mxu0 %v1802
      %1838 = vmatprep.subr.mxu0 %v1801
      %1839 = vmatpush1.msra.mxu0 %v1800
      %1840 = vmatprep.subr.mxu0 %v1799
      %1841 = vmatpush1.msra.mxu0 %v1798
      %1842 = vmatprep.subr.mxu0 %v1797
      %1843 = vmatpush1.msra.mxu0 %v1796
      %1844 = vmatprep.subr.mxu0 %v1795
      %1845 = vmatpush1.msra.mxu0 %v1794
      %1846 = vmatprep.subr.mxu0 %v1793
      %1847 = vmatpush1.msra.mxu0 %v1792
      %1848 = vmatprep.subr.mxu0 0.0
      %1849 = vmatpush2.msra.mxu0 0.0
      %1850 = vmatprep.subr.mxu0 0.0
      %1851 = vmatpush2.msra.mxu0 0.0
      %1852 = vmatprep.subr.mxu0 0.0
      %1853 = vmatpush2.msra.mxu0 0.0
      %1854 = vmatprep.subr.mxu0 0.0
      %1855 = vmatpush2.msra.mxu0 0.0
      %1856 = vmatprep.subr.mxu0 0.0
      %1857 = vmatpush2.msra.mxu0 0.0
      %1858 = vmatprep.subr.mxu0 0.0
      %1859 = vmatpush2.msra.mxu0 0.0
      %1860 = vmatprep.subr.mxu0 0.0
      %1861 = vmatpush2.msra.mxu0 0.0
      %1862 = vmatprep.subr.mxu0 0.0
      %1863 = vmatpush2.msra.mxu0 0.0
      %1864 = vmatprep.subr.mxu0 0.0
      %1865 = vmatpush2.msra.mxu0 0.0
      %1866 = vmatprep.subr.mxu0 0.0
      %1867 = vmatpush2.msra.mxu0 0.0
      %1868 = vmatprep.subr.mxu0 0.0
      %1869 = vmatpush2.msra.mxu0 0.0
      %1870 = vmatprep.subr.mxu0 0.0
      %1871 = vmatpush2.msra.mxu0 0.0
      %1872 = vmatprep.subr.mxu0 0.0
      %1873 = vmatpush2.msra.mxu0 0.0
      %1874 = vmatprep.subr.mxu0 0.0
      %1875 = vmatpush2.msra.mxu0 0.0
      %1876 = vmatprep.subr.mxu0 0.0
      %1877 = vmatpush2.msra.mxu0 0.0
      %1878 = vmatprep.subr.mxu0 0.0
      %1879 = vmatpush2.msra.mxu0 0.0
      %1880 = vmatprep.mubr.f32.mxu0 0.0
      %1881 = vmatmul.mubr.f32.gmra.mxu0 %v1811
      %v1882 = vpop.f32.mrf.mxu0
      %v1883 = vadd.f32 0.0, %v1882
      %v1884 = vpop.f32.mrf.mxu0
      %v1885 = vadd.f32 0.0, %v1884
      %1886 = vmatprep.mubr.f32.mxu0 0.0
      %1887 = vmatmul.mubr.f32.gmra.mxu0 %v1814
      %v1888 = vpop.f32.mrf.mxu0
      %v1889 = vadd.f32 0.0, %v1888
      %v1890 = vpop.f32.mrf.mxu0
      %v1891 = vadd.f32 0.0, %v1890
      %1892 = vdwg.mxu0
      %v1893 = vld [vmem:[%s9] sm:$0x3]
      %v1894 = vld [vmem:[#allocation2] sm:$0x1]
      %1899 = vrot.lane.b32.xlu0 %v1883, 1
      %v1900 = vpop.permute.xlu0 %1899
      %1901 = vrot.lane.b32.xlu0 %v1885, 1
      %v1902 = vpop.permute.xlu0 %1901
      %1903 = vrot.lane.b32.xlu0 %v1889, 1
      %v1904 = vpop.permute.xlu0 %1903
      %1905 = vrot.lane.b32.xlu0 %v1891, 1
      %v1906 = vpop.permute.xlu0 %1905
      %v1907 = vsel %vm542, %v1900, %v1902
      %v1908 = vsel %vm542, %v1904, %v1906
      %v1913 = vsel %vm542, 0.0, %v1900
      %v1914 = vsel %vm542, 0.0, %v1904
      %v1915 = vsel %vm525, 1, 0
      %v1916 = vsel %vm526, 1, 0
      %vm1917 = vcmp.eq.s32.totalorder %v1915, 1
      %vm1918 = vcmp.eq.s32.totalorder %v1916, 1
      %v1919 = vsel %vm1917, %v1913, 0.0
      %v1920 = vsel %vm1918, %v1907, 0.0
      %v1921 = vsel %vm1917, %v1914, 0.0
      %v1922 = vsel %vm1918, %v1908, 0.0
      %1923 = vrot.lane.b32.xlu0 %v1883, 127
      %v1924 = vpop.permute.xlu0 %1923
      %1925 = vrot.lane.b32.xlu0 %v1885, 127
      %v1926 = vpop.permute.xlu0 %1925
      %1927 = vrot.lane.b32.xlu0 %v1889, 127
      %v1928 = vpop.permute.xlu0 %1927
      %1929 = vrot.lane.b32.xlu0 %v1891, 127
      %v1930 = vpop.permute.xlu0 %1929
      %v1931 = vsel %vm553, %v1924, %v1926
      %v1932 = vsel %vm553, %v1928, %v1930
      %v1937 = vsel %vm553, %v1926, 0.0
      %v1938 = vsel %vm553, %v1930, 0.0
      %v1939 = vsel %vm527, 1, 0
      %v1940 = vsel %vm528, 1, 0
      %vm1941 = vcmp.eq.s32.totalorder %v1939, 1
      %vm1942 = vcmp.eq.s32.totalorder %v1940, 1
      %v1943 = vsel %vm1941, %v1931, 0.0
      %v1944 = vsel %vm1942, %v1937, 0.0
      %v1945 = vsel %vm1941, %v1932, 0.0
      %v1946 = vsel %vm1942, %v1938, 0.0
      %1951 = vrot.lane.b32.xlu0 %v1919, 16
      %v1952 = vpop.permute.xlu0 %1951
      %1953 = vrot.lane.b32.xlu0 %v1920, 16
      %v1954 = vpop.permute.xlu0 %1953
      %1955 = vrot.lane.b32.xlu0 %v1921, 16
      %v1956 = vpop.permute.xlu0 %1955
      %1957 = vrot.lane.b32.xlu0 %v1922, 16
      %v1958 = vpop.permute.xlu0 %1957
      %v1959 = vsel %vm566, %v1952, %v1954
      %v1960 = vsel %vm566, %v1956, %v1958
      %v1965 = vsel %vm566, 0.0, %v1952
      %v1966 = vsel %vm566, 0.0, %v1956
      %1967 = vrot.lane.b32.xlu0 %v1883, 16
      %v1968 = vpop.permute.xlu0 %1967
      %1969 = vrot.lane.b32.xlu0 %v1885, 16
      %v1970 = vpop.permute.xlu0 %1969
      %1971 = vrot.lane.b32.xlu0 %v1889, 16
      %v1972 = vpop.permute.xlu0 %1971
      %1973 = vrot.lane.b32.xlu0 %v1891, 16
      %v1974 = vpop.permute.xlu0 %1973
      %v1975 = vsel %vm566, %v1968, %v1970
      %v1976 = vsel %vm566, %v1972, %v1974
      %v1981 = vsel %vm566, 0.0, %v1968
      %v1982 = vsel %vm566, 0.0, %v1972
      %1987 = vrot.lane.b32.xlu0 %v1943, 16
      %v1988 = vpop.permute.xlu0 %1987
      %1989 = vrot.lane.b32.xlu0 %v1944, 16
      %v1990 = vpop.permute.xlu0 %1989
      %1991 = vrot.lane.b32.xlu0 %v1945, 16
      %v1992 = vpop.permute.xlu0 %1991
      %1993 = vrot.lane.b32.xlu0 %v1946, 16
      %v1994 = vpop.permute.xlu0 %1993
      %v1995 = vsel %vm566, %v1988, %v1990
      %v1996 = vsel %vm566, %v1992, %v1994
      %v2001 = vsel %vm566, 0.0, %v1988
      %v2002 = vsel %vm566, 0.0, %v1992
      %2003 = vrot.lane.b32.xlu0 %v1919, 112
      %v2004 = vpop.permute.xlu0 %2003
      %2005 = vrot.lane.b32.xlu0 %v1920, 112
      %v2006 = vpop.permute.xlu0 %2005
      %2007 = vrot.lane.b32.xlu0 %v1921, 112
      %v2008 = vpop.permute.xlu0 %2007
      %2009 = vrot.lane.b32.xlu0 %v1922, 112
      %v2010 = vpop.permute.xlu0 %2009
      %v2011 = vsel %vm591, %v2004, %v2006
      %v2012 = vsel %vm591, %v2008, %v2010
      %v2017 = vsel %vm591, %v2006, 0.0
      %v2018 = vsel %vm591, %v2010, 0.0
      %2019 = vrot.lane.b32.xlu0 %v1883, 112
      %v2020 = vpop.permute.xlu0 %2019
      %2021 = vrot.lane.b32.xlu0 %v1885, 112
      %v2022 = vpop.permute.xlu0 %2021
      %2023 = vrot.lane.b32.xlu0 %v1889, 112
      %v2024 = vpop.permute.xlu0 %2023
      %2025 = vrot.lane.b32.xlu0 %v1891, 112
      %v2026 = vpop.permute.xlu0 %2025
      %v2027 = vsel %vm591, %v2020, %v2022
      %v2028 = vsel %vm591, %v2024, %v2026
      %v2033 = vsel %vm591, %v2022, 0.0
      %v2034 = vsel %vm591, %v2026, 0.0
      %2035 = vrot.lane.b32.xlu0 %v1943, 112
      %v2036 = vpop.permute.xlu0 %2035
      %2037 = vrot.lane.b32.xlu0 %v1944, 112
      %v2038 = vpop.permute.xlu0 %2037
      %2039 = vrot.lane.b32.xlu0 %v1945, 112
      %v2040 = vpop.permute.xlu0 %2039
      %2041 = vrot.lane.b32.xlu0 %v1946, 112
      %v2042 = vpop.permute.xlu0 %2041
      %v2043 = vsel %vm591, %v2036, %v2038
      %v2044 = vsel %vm591, %v2040, %v2042
      %v2049 = vsel %vm591, %v2038, 0.0
      %v2050 = vsel %vm591, %v2042, 0.0
      %v2051 = vpack.c.bf16 %v1966, %v1965
      %v2052 = vpack.c.bf16 %v1960, %v1959
      %v2053 = vpack.c.bf16 %v1982, %v1981
      %v2054 = vpack.c.bf16 %v1976, %v1975
      %v2055 = vpack.c.bf16 %v2002, %v2001
      %v2056 = vpack.c.bf16 %v1996, %v1995
      %v2057 = vpack.c.bf16 %v1921, %v1919
      %v2058 = vpack.c.bf16 %v1922, %v1920
      %v2059 = vpack.c.bf16 %v1889, %v1883
      %v2060 = vpack.c.bf16 %v1891, %v1885
      %v2061 = vpack.c.bf16 %v1945, %v1943
      %v2062 = vpack.c.bf16 %v1946, %v1944
      %v2063 = vpack.c.bf16 %v2012, %v2011
      %v2064 = vpack.c.bf16 %v2018, %v2017
      %v2065 = vpack.c.bf16 %v2028, %v2027
      %v2066 = vpack.c.bf16 %v2034, %v2033
      %v2067 = vpack.c.bf16 %v2044, %v2043
      %v2068 = vpack.c.bf16 %v2050, %v2049
      %2070 = vset.pattern.permute.xlu0 0
      %2071 = vperm.xlu0 %2070, %v1894
      %v2072 = vpop.permute.xlu0 %2071
      %v2074 = vlaneseq
      %v2075 = vshrl.u32 %v2074, 7
      %v2076 = vsub.s32 0, %v2075
      %v2077 = vrot.slane %v2072, %v2076
      %v2080 = vunpack.c.l.s4 1966171168
      %v2081 = vunpack.c.0.s8 %v2080
      %v2082 = vlaneseq
      %v2083 = vshrl.u32 %v2082, 7
      %v2084 = vsub.s32 %v2081, %v2083
      %v2085 = vrot.slane %v1893, %v2084
      %v2086 = vcombine.high %v2085, %v2085
      %v2088 = vunpack.c.l.s4 1966171168
      %v2089 = vunpack.c.0.s8 %v2088
      %v2090 = vlaneseq
      %v2091 = vshrl.u32 %v2090, 7
      %v2092 = vsub.s32 %v2089, %v2091
      %v2093 = vrot.slane %v2085, %v2092
      %v2095 = vunpack.c.l.s4 1966171168
      %v2096 = vunpack.c.0.s8 %v2095
      %v2097 = vlaneseq
      %v2098 = vshrl.u32 %v2097, 7
      %v2099 = vsub.s32 %v2096, %v2098
      %v2100 = vrot.slane %v2086, %v2099
      %v2103 = vsel %vm566, %v2100, 0
      %2105 = vmatprep.subr.bf16.mxu0 %v2066
      %2106 = vmatpush1.bf16.msra.mxu0 %v2065
      %2107 = vmatprep.subr.bf16.mxu0 %v2064
      %2108 = vmatpush1.bf16.msra.mxu0 %v2063
      %2109 = vmatprep.subr.bf16.mxu0 %v2062
      %2110 = vmatpush1.bf16.msra.mxu0 %v2061
      %2111 = vmatprep.subr.bf16.mxu0 %v2060
      %2112 = vmatpush1.bf16.msra.mxu0 %v2059
      %2113 = vmatprep.subr.bf16.mxu0 %v2058
      %2114 = vmatpush1.bf16.msra.mxu0 %v2057
      %2115 = vmatprep.subr.bf16.mxu0 %v2056
      %2116 = vmatpush1.bf16.msra.mxu0 %v2055
      %2117 = vmatprep.subr.bf16.mxu0 %v2054
      %2118 = vmatpush1.bf16.msra.mxu0 %v2053
      %2119 = vmatprep.subr.bf16.mxu0 %v2052
      %2120 = vmatpush1.bf16.msra.mxu0 %v2051
      %2121 = vmatprep.subr.bf16.mxu0 0
      %2122 = vmatpush2.bf16.msra.mxu0 0
      %2123 = vmatprep.subr.bf16.mxu0 0
      %2124 = vmatpush2.bf16.msra.mxu0 0
      %2125 = vmatprep.subr.bf16.mxu0 0
      %2126 = vmatpush2.bf16.msra.mxu0 0
      %2127 = vmatprep.subr.bf16.mxu0 0
      %2128 = vmatpush2.bf16.msra.mxu0 0
      %2129 = vmatprep.subr.bf16.mxu0 0
      %2130 = vmatpush2.bf16.msra.mxu0 0
      %2131 = vmatprep.subr.bf16.mxu0 0
      %2132 = vmatpush2.bf16.msra.mxu0 0
      %2133 = vmatprep.subr.bf16.mxu0 0
      %2134 = vmatpush2.bf16.msra.mxu0 0
      %2135 = vmatprep.subr.bf16.mxu0 %v2068
      %2136 = vmatpush2.bf16.msra.mxu0 %v2067
      %2137 = vmatprep.mubr.bf16.mxu0 %v2103
      %2138 = vmatmul.mubr.bf16.gmra.mxu0 %v2093
      %v2139 = vpop.f32.mrf.mxu0
      %v2140 = vadd.f32 %v2077, %v2139
      %v2141 = vpop.f32.mrf.mxu0
      %v2142 = vadd.f32 %v2077, %v2141
      %v2143 = vpop.f32.mrf.mxu0
      %v2144 = vpop.f32.mrf.mxu0
      %2145 = vdwg.mxu0
      %v2146 = vtanh.pop %v2140
      %v2147 = vtanh.pop %v2142
      %v2150 = vcombine.low %v2146, %v2147
      %v2152 = vunpack.c.l.s4 1966171168
      %v2153 = vunpack.c.0.s8 %v2152
      %v2154 = vlaneseq
      %v2155 = vshrl.u32 %v2154, 7
      %v2156 = vsub.s32 %v2153, %v2155
      %v2157 = vrot.slane %v2150, %v2156
      %v2159 = vunpack.c.l.s4 1966171168
      %v2160 = vunpack.c.0.s8 %v2159
      %v2161 = vlaneseq
      %v2162 = vshrl.u32 %v2161, 7
      %v2163 = vsub.s32 %v2160, %v2162
      %v2164 = vrot.slane %v2157, %v2163
      %v2166 = vlaneseq
      %vm2167 = vcmp.ge.s32.totalorder %v2166, 0
      %vm2168 = vcmp.lt.s32.totalorder %v2166, 256
      %vm2169 = vmand %vm2167, %vm2168
      %2170 = vst.msk [vmem:[%s491] sm:$0x3] %vm2169, %v2164
      %p2171 = scmp.lt.s32.totalorder %s28, 1
      %s2172 = scalar_select %p2171, %s28, 1
      %s2173 = smul.addr %s2172, 2
      %s2174 = scalar_lea.vmem %s15, %s2173
      // Predicated region
      $region81: #{net_forward.1} parent=79 // pred_check
        %p2175 = pneg %p366
      $region82: #{net_forward.1} parent=79 // pred_check_branch
        %2177 = sbr.rel (%p2175) target = $region84
      $region83: #{net_forward.1} parent=79 // pred_region
        _
      $region84: #{net_forward.1} parent=79 // pred_fallthru
        _
    $region80: #{net_forward.1} parent=5 // pred_fallthru
      _
    %p2178 = scmp.le.s32.totalorder 2, %s23
    // Predicated region
    $region85: #{net_forward.1} parent=5 // pred_check
      %p2179 = pneg %p2178
    $region86: #{net_forward.1} parent=5 // pred_check_branch
      %2181 = sbr.rel (%p2179) target = $region88
    $region87: #{net_forward.1} parent=5 // pred_region
      %s2182 = ssub.s32 %s23, 2
      // Predicated region
      $region89: #{net_forward.1} parent=87 // pred_check
        %p2183 = pneg %p372
      $region90: #{net_forward.1} parent=87 // pred_check_branch
        %2185 = sbr.rel (%p2183) target = $region92
      $region91: #{net_forward.1} parent=87 // pred_region
        %p2186 = scmp.lt.s32.totalorder %s29, 1
        %s2187 = scalar_select %p2186, %s29, 1
        %s2188 = smul.addr %s2187, 2
        %s2189 = scalar_lea.vmem %s15, %s2188
      $region92: #{net_forward.1} parent=87 // pred_fallthru
        _
    $region88: #{net_forward.1} parent=5 // pred_fallthru
      _
  $region6: #{net_forward.1} parent=0 // loop_footer
    %s27 = sadd.s32 1, %s23
  $region7: #{net_forward.1} parent=0 // loop_footer_branch
    %22 = sbr.rel target = $region3
  $region8: #{net_forward.1} parent=0 // loop_exit
    _

</llo_original>
